<compile_context>
chip_gen: v7x
topology: tpu7x:2x2x1
jax: 0.10.0
libtpu: 0.0.40
codegen_flags: <defaults>
</compile_context>

<pallas_src>
import functools

import jax
import jax.numpy as jnp
from jax.experimental import pallas as pl
from jax.experimental.pallas import tpu as pltpu


# ----------------------------------------------------------------------------
# Fused Pallas kernel
# ----------------------------------------------------------------------------
def tcn_fused_kernel(x_ref, w1_ref, b1_ref, w2_ref, b2_ref, wd_ref, bd_ref,
                     lw_ref, lb_ref, o_ref, buf_ref, col_ref,
                     *, K, L, T, pad_top, has_ds0):
    """Whole TCN for one batch tile.

    x_ref : (bb, T, Cp)          channel-padded input (channels-last)
    w1_ref: (L, K*Cp, Cp)        conv1 weights per layer, im2col-flattened
    b1_ref: (L, 1, Cp)
    w2_ref: (L, K*Cp, Cp)        conv2 weights per layer
    b2_ref: (L, 1, Cp)
    wd_ref: (Cp, Cp)             layer-0 1x1 downsample (zeros if unused)
    bd_ref: (1, Cp)
    lw_ref: (Cp, Np)             final Linear weight, lane-dense (col 0 valid)
    lb_ref: (1, Np)
    o_ref : (bb, Np)             output slab; column 0 holds the prediction
    buf_ref: (bb, pad_top+T, Cp) VMEM scratch: causally pre-padded activation
    col_ref: (bb, T, K*Cp)       VMEM scratch: im2col slab
    """
    bb = x_ref.shape[0]
    Cp = x_ref.shape[2]

    # Zero only the causal-pad region once (sublane-aligned: pad_top % 8 == 0).
    # Activation rows (>= pad_top) are fully overwritten before every read, so
    # they never need initialization; pad rows stay zero for every layer.
    buf_ref[:, :pad_top, :] = jnp.zeros((bb, pad_top, Cp), jnp.float32)

    def dilated_causal_conv(h_in, w_flat, bias, dilation):
        """relu(causal dilated conv(h_in) + bias) via one im2col matmul."""
        pad = (K - 1) * dilation
        buf_ref[:, pad_top:, :] = h_in                      # aligned store
        for k in range(K):                                  # K static slices -> im2col slab
            off = pad_top - pad + k * dilation              # static python int, >= 0
            col_ref[:, :, k * Cp:(k + 1) * Cp] = buf_ref[:, off:off + T, :]
        slab = col_ref[...].reshape(bb * T, K * Cp)         # fold batch into MXU M dim
        y = jnp.dot(slab, w_flat, preferred_element_type=jnp.float32)
        y = jnp.maximum(y + bias, 0.0)
        return y.reshape(bb, T, Cp)

    h = x_ref[...]                                          # (bb, T, Cp), VMEM-resident f32
    for l in range(L):                                      # L is static -> unrolled
        dilation = 2 ** l
        h_in = h
        h1 = dilated_causal_conv(h_in, w1_ref[l], b1_ref[l], dilation)
        # TODO(synk): dropout is identity at inference time, omitted.
        h2 = dilated_causal_conv(h1, w2_ref[l], b2_ref[l], dilation)
        if l == 0 and has_ds0:                              # 1x1 downsample on the residual
            res = (jnp.dot(h_in.reshape(bb * T, Cp), wd_ref[...],
                           preferred_element_type=jnp.float32)
                   + bd_ref[...]).reshape(bb, T, Cp)
        else:
            res = h_in
        h = jnp.maximum(h2 + res, 0.0)

    # Final nn.Linear on the last time step only; lane-dense store (col 0 valid).
    last = h[:, T - 1, :]                                   # (bb, Cp)
    o_ref[...] = jnp.dot(last, lw_ref[...],
                         preferred_element_type=jnp.float32) + lb_ref[...]


# ----------------------------------------------------------------------------
# Wrapper: pad / flatten parameters, single pallas_call
# ----------------------------------------------------------------------------
def _round_up(n, m):
    return ((n + m - 1) // m) * m


def tcn_forward(x, block_params, lin_w, lin_b):
    """Equivalent of TCN.forward: x is (B, T, input_dim) -> (B,)."""
    B, T, Cin = x.shape
    L = len(block_params)
    K = block_params[0]["w1"].shape[0]
    hidden = block_params[0]["w1"].shape[2]
    Cp = _round_up(max(Cin, hidden), 128)   # lane-dense channel dim
    Np = 128                                # lane-dense final-linear output slab

    # Only the last receptive field influences output[:, -1, :].
    rf = 1 + 2 * (K - 1) * (2 ** L - 1)
    if T > rf:
        x = x[:, -rf:, :]
        T = rf
    maxpad = (K - 1) * (2 ** (L - 1))
    pad_top = _round_up(maxpad, 8)          # sublane-aligned causal-pad region

    # --- pad / reshape parameters to lane-dense, MXU-friendly layouts --------
    xpad = jnp.pad(x.astype(jnp.float32), ((0, 0), (0, 0), (0, Cp - Cin)))

    w1s, b1s, w2s, b2s = [], [], [], []
    for p in block_params:
        cin = p["w1"].shape[1]
        w1 = jnp.pad(p["w1"], ((0, 0), (0, Cp - cin), (0, Cp - hidden)))
        w2 = jnp.pad(p["w2"], ((0, 0), (0, Cp - hidden), (0, Cp - hidden)))
        w1s.append(w1.reshape(K * Cp, Cp))
        w2s.append(w2.reshape(K * Cp, Cp))
        b1s.append(jnp.pad(p["b1"], ((0, 0), (0, Cp - hidden))))
        b2s.append(jnp.pad(p["b2"], ((0, 0), (0, Cp - hidden))))
    w1s, w2s = jnp.stack(w1s), jnp.stack(w2s)
    b1s, b2s = jnp.stack(b1s), jnp.stack(b2s)

    has_ds0 = (Cin != hidden)               # only layer 0 can need a downsample
    if has_ds0:
        wd = jnp.pad(block_params[0]["wd"], ((0, Cp - Cin), (0, Cp - hidden)))
        bd = jnp.pad(block_params[0]["bd"], ((0, 0), (0, Cp - hidden)))
    else:
        wd = jnp.zeros((Cp, Cp), jnp.float32)
        bd = jnp.zeros((1, Cp), jnp.float32)

    lw = jnp.pad(lin_w, ((0, Cp - hidden), (0, Np - 1)))
    lb = jnp.pad(lin_b, ((0, 0), (0, Np - 1)))

    # Batch tiling: whole batch per grid step when small; for large B split
    # into bb-sized tiles so the "parallel" axis can shard across TensorCores
    # and the VMEM scratch stays bounded.
    bb = B
    if B > 8:
        for cand in (256, 128, 64, 32, 16, 8):
            if B % cand == 0:
                bb = cand
                break
    grid = (B // bb,)

    kernel = functools.partial(tcn_fused_kernel, K=K, L=L, T=T,
                               pad_top=pad_top, has_ds0=has_ds0)

    out = pl.pallas_call(
        kernel,
        out_shape=jax.ShapeDtypeStruct((B, Np), jnp.float32),
        grid=grid,
        in_specs=[
            pl.BlockSpec((bb, T, Cp), lambda i: (i, 0, 0)),
            pl.BlockSpec((L, K * Cp, Cp), lambda i: (0, 0, 0)),
            pl.BlockSpec((L, 1, Cp), lambda i: (0, 0, 0)),
            pl.BlockSpec((L, K * Cp, Cp), lambda i: (0, 0, 0)),
            pl.BlockSpec((L, 1, Cp), lambda i: (0, 0, 0)),
            pl.BlockSpec((Cp, Cp), lambda i: (0, 0)),
            pl.BlockSpec((1, Cp), lambda i: (0, 0)),
            pl.BlockSpec((Cp, Np), lambda i: (0, 0)),
            pl.BlockSpec((1, Np), lambda i: (0, 0)),
        ],
        out_specs=pl.BlockSpec((bb, Np), lambda i: (i, 0)),
        scratch_shapes=[
            pltpu.VMEM((bb, pad_top + T, Cp), jnp.float32),  # causal-pad buffer
            pltpu.VMEM((bb, T, K * Cp), jnp.float32),        # im2col slab
        ],
        compiler_params=pltpu.CompilerParams(
            dimension_semantics=("parallel",),
            vmem_limit_bytes=32 * 1024 * 1024),
    )(xpad, w1s, b1s, w2s, b2s, wd, bd, lw, lb)

    return out[:, 0]                       # (B,)  — .squeeze() on (B, 1)


# ----------------------------------------------------------------------------
# Pure-JAX reference (same math, no Pallas) for sanity checking
# ----------------------------------------------------------------------------
def ref_block(x, w1, b1, w2, b2, wd, bd, dilation):
    B, T, Cin = x.shape
    K, _, Ch = w1.shape
    pad = (K - 1) * dilation
    xp = jnp.pad(x, ((0, 0), (pad, 0), (0, 0)))
    h1 = sum(jnp.einsum("btc,cd->btd", xp[:, k * dilation:k * dilation + T], w1[k])
             for k in range(K)) + b1
    h1 = jnp.maximum(h1, 0.0)
    hp = jnp.pad(h1, ((0, 0), (pad, 0), (0, 0)))
    h2 = sum(jnp.einsum("btc,cd->btd", hp[:, k * dilation:k * dilation + T], w2[k])
             for k in range(K)) + b2
    h2 = jnp.maximum(h2, 0.0)
    res = jnp.einsum("btc,cd->btd", x, wd) + bd if Cin != Ch else x
    return jnp.maximum(h2 + res, 0.0)


def ref_forward(x, block_params, lin_w, lin_b):
    h = x
    for i, p in enumerate(block_params):
        h = ref_block(h, p["w1"], p["b1"], p["w2"], p["b2"], p["wd"], p["bd"], 2 ** i)
    return jnp.squeeze(h[:, -1, :] @ lin_w + lin_b, axis=-1)


# ----------------------------------------------------------------------------
# Deterministic parameter init + run
# ----------------------------------------------------------------------------
def init_params(key, input_dim, hidden, num_layers, K):
    block_params = []
    for i in range(num_layers):
        cin = input_dim if i == 0 else hidden
        key, k1, k2, k3, k4, k5, k6 = jax.random.split(key, 7)
        bnd1 = (1.0 / (cin * K)) ** 0.5
        bnd2 = (1.0 / (hidden * K)) ** 0.5
        bndd = (1.0 / cin) ** 0.5
        block_params.append(dict(
            w1=jax.random.uniform(k1, (K, cin, hidden), jnp.float32, -bnd1, bnd1),
            b1=jax.random.uniform(k2, (1, hidden), jnp.float32, -bnd1, bnd1),
            w2=jax.random.uniform(k3, (K, hidden, hidden), jnp.float32, -bnd2, bnd2),
            b2=jax.random.uniform(k4, (1, hidden), jnp.float32, -bnd2, bnd2),
            wd=(jax.random.uniform(k5, (cin, hidden), jnp.float32, -bndd, bndd)
                if cin != hidden else jnp.zeros((cin, hidden), jnp.float32)),
            bd=(jax.random.uniform(k6, (1, hidden), jnp.float32, -bndd, bndd)
                if cin != hidden else jnp.zeros((1, hidden), jnp.float32)),
        ))
    key, kw, kb = jax.random.split(key, 3)
    bnd = (1.0 / hidden) ** 0.5
    lin_w = jax.random.uniform(kw, (hidden, 1), jnp.float32, -bnd, bnd)
    lin_b = jax.random.uniform(kb, (1, 1), jnp.float32, -bnd, bnd)
    return block_params, lin_w, lin_b


if __name__ == "__main__":
    # params: input_dim=4, hidden_dim=32, num_layers=2, kernel_size=3, dropout=0 (eval)
    B, T, input_dim = 2, 8, 4
    hidden, num_layers, K = 32, 2, 3

    key = jax.random.PRNGKey(0)
    key, kx = jax.random.split(key)
    x = jax.random.normal(kx, (B, T, input_dim), dtype=jnp.float32)

    block_params, lin_w, lin_b = init_params(key, input_dim, hidden, num_layers, K)

    out = tcn_forward(x, block_params, lin_w, lin_b)
    out = jax.block_until_ready(out)

    ref = ref_forward(x, block_params, lin_w, lin_b)
    assert out.shape == (B,), out.shape
    assert jnp.allclose(out, ref, atol=1e-4, rtol=1e-4), (out, ref)

    print("KERNEL_OK")
</pallas_src>

<mosaic_0001>
module attributes {stable_mosaic.version = 11 : i64} {
  func.func @tcn_fused_kernel(%arg0: i32, %arg1: memref<2x8x128xf32, #tpu.memory_space<vmem>>, %arg2: memref<2x384x128xf32, #tpu.memory_space<vmem>>, %arg3: memref<2x1x128xf32, #tpu.memory_space<vmem>>, %arg4: memref<2x384x128xf32, #tpu.memory_space<vmem>>, %arg5: memref<2x1x128xf32, #tpu.memory_space<vmem>>, %arg6: memref<128x128xf32, #tpu.memory_space<vmem>>, %arg7: memref<1x128xf32, #tpu.memory_space<vmem>>, %arg8: memref<128x128xf32, #tpu.memory_space<vmem>>, %arg9: memref<1x128xf32, #tpu.memory_space<vmem>>, %arg10: memref<2x128xf32, #tpu.memory_space<vmem>>, %arg11: memref<2x16x128xf32, #tpu.memory_space<vmem>>, %arg12: memref<2x8x384xf32, #tpu.memory_space<vmem>>) attributes {dimension_semantics = [#tpu.dimension_semantics<parallel>], iteration_bounds = array<i64: 1>, scalar_prefetch = 0 : i64, scratch_operands = 2 : i64, tpu.core_type = #tpu.core_type<tc>, window_params = [{transform_indices = @transform_0, window_bounds = array<i64: 2, 8, 128>}, {pipeline_mode = #tpu.pipeline_mode<synchronous>, transform_indices = @transform_1, window_bounds = array<i64: 2, 384, 128>}, {pipeline_mode = #tpu.pipeline_mode<synchronous>, transform_indices = @transform_2, window_bounds = array<i64: 2, 1, 128>}, {pipeline_mode = #tpu.pipeline_mode<synchronous>, transform_indices = @transform_3, window_bounds = array<i64: 2, 384, 128>}, {pipeline_mode = #tpu.pipeline_mode<synchronous>, transform_indices = @transform_4, window_bounds = array<i64: 2, 1, 128>}, {pipeline_mode = #tpu.pipeline_mode<synchronous>, transform_indices = @transform_5, window_bounds = array<i64: 128, 128>}, {pipeline_mode = #tpu.pipeline_mode<synchronous>, transform_indices = @transform_6, window_bounds = array<i64: 1, 128>}, {pipeline_mode = #tpu.pipeline_mode<synchronous>, transform_indices = @transform_7, window_bounds = array<i64: 128, 128>}, {pipeline_mode = #tpu.pipeline_mode<synchronous>, transform_indices = @transform_8, window_bounds = array<i64: 1, 128>}, {transform_indices = @transform_9, window_bounds = array<i64: 2, 128>}]} {
    %cst = arith.constant 0.000000e+00 : f32
    %0 = vector.broadcast %cst : f32 to vector<2x8x128xf32>
    %c0 = arith.constant 0 : index
    %c0_0 = arith.constant 0 : index
    %c0_1 = arith.constant 0 : index
    %1 = vector.load %arg11[%c0, %c0_0, %c0_1] : memref<2x16x128xf32, #tpu.memory_space<vmem>>, vector<2x8x128xf32>
    tpu.vector_store %arg11[%c0, %c0_0, %c0_1], %0 {strides = array<i32>} : memref<2x16x128xf32, #tpu.memory_space<vmem>>, vector<2x8x128xf32>,
    %c0_2 = arith.constant 0 : index
    %c0_3 = arith.constant 0 : index
    %c0_4 = arith.constant 0 : index
    %2 = vector.load %arg1[%c0_2, %c0_3, %c0_4] : memref<2x8x128xf32, #tpu.memory_space<vmem>>, vector<2x8x128xf32>
    %c0_5 = arith.constant 0 : index
    %c0_6 = arith.constant 0 : index
    %c0_7 = arith.constant 0 : index
    %3 = vector.load %arg2[%c0_5, %c0_6, %c0_7] : memref<2x384x128xf32, #tpu.memory_space<vmem>>, vector<1x384x128xf32>
    %4 = vector.shape_cast %3 : vector<1x384x128xf32> to vector<384x128xf32>
    %c0_8 = arith.constant 0 : index
    %c0_9 = arith.constant 0 : index
    %c0_10 = arith.constant 0 : index
    %5 = vector.load %arg3[%c0_8, %c0_9, %c0_10] : memref<2x1x128xf32, #tpu.memory_space<vmem>>, vector<1x1x128xf32>
    %6 = vector.shape_cast %5 : vector<1x1x128xf32> to vector<1x128xf32>
    %c0_11 = arith.constant 0 : index
    %c8 = arith.constant 8 : index
    %c0_12 = arith.constant 0 : index
    %7 = vector.load %arg11[%c0_11, %c8, %c0_12] : memref<2x16x128xf32, #tpu.memory_space<vmem>>, vector<2x8x128xf32>
    tpu.vector_store %arg11[%c0_11, %c8, %c0_12], %2 {strides = array<i32>} : memref<2x16x128xf32, #tpu.memory_space<vmem>>, vector<2x8x128xf32>,
    %c0_13 = arith.constant 0 : index
    %c6 = arith.constant 6 : index
    %c0_14 = arith.constant 0 : index
    %8 = vector.load %arg11[%c0_13, %c6, %c0_14] : memref<2x16x128xf32, #tpu.memory_space<vmem>>, vector<2x8x128xf32>
    %c0_15 = arith.constant 0 : index
    %c0_16 = arith.constant 0 : index
    %c0_17 = arith.constant 0 : index
    %9 = vector.load %arg12[%c0_15, %c0_16, %c0_17] : memref<2x8x384xf32, #tpu.memory_space<vmem>>, vector<2x8x128xf32>
    tpu.vector_store %arg12[%c0_15, %c0_16, %c0_17], %8 {strides = array<i32>} : memref<2x8x384xf32, #tpu.memory_space<vmem>>, vector<2x8x128xf32>,
    %c0_18 = arith.constant 0 : index
    %c7 = arith.constant 7 : index
    %c0_19 = arith.constant 0 : index
    %10 = vector.load %arg11[%c0_18, %c7, %c0_19] : memref<2x16x128xf32, #tpu.memory_space<vmem>>, vector<2x8x128xf32>
    %c0_20 = arith.constant 0 : index
    %c0_21 = arith.constant 0 : index
    %c128 = arith.constant 128 : index
    %11 = vector.load %arg12[%c0_20, %c0_21, %c128] : memref<2x8x384xf32, #tpu.memory_space<vmem>>, vector<2x8x128xf32>
    tpu.vector_store %arg12[%c0_20, %c0_21, %c128], %10 {strides = array<i32>} : memref<2x8x384xf32, #tpu.memory_space<vmem>>, vector<2x8x128xf32>,
    %c0_22 = arith.constant 0 : index
    %c8_23 = arith.constant 8 : index
    %c0_24 = arith.constant 0 : index
    %12 = vector.load %arg11[%c0_22, %c8_23, %c0_24] : memref<2x16x128xf32, #tpu.memory_space<vmem>>, vector<2x8x128xf32>
    %c0_25 = arith.constant 0 : index
    %c0_26 = arith.constant 0 : index
    %c256 = arith.constant 256 : index
    %13 = vector.load %arg12[%c0_25, %c0_26, %c256] : memref<2x8x384xf32, #tpu.memory_space<vmem>>, vector<2x8x128xf32>
    tpu.vector_store %arg12[%c0_25, %c0_26, %c256], %12 {strides = array<i32>} : memref<2x8x384xf32, #tpu.memory_space<vmem>>, vector<2x8x128xf32>,
    %c0_27 = arith.constant 0 : index
    %c0_28 = arith.constant 0 : index
    %c0_29 = arith.constant 0 : index
    %14 = vector.load %arg12[%c0_27, %c0_28, %c0_29] : memref<2x8x384xf32, #tpu.memory_space<vmem>>, vector<2x8x384xf32>
    %15 = vector.shape_cast %14 : vector<2x8x384xf32> to vector<16x384xf32>
    %cst_30 = arith.constant dense<0.000000e+00> : vector<16x128xf32>
    %16 = tpu.matmul %15, %4, %cst_30 {dimension_numbers = #tpu.dot_dimension_numbers<[1], [0], [0], [1], [0, 0, 1, 1], [], []>} : vector<16x384xf32>, vector<384x128xf32>, vector<16x128xf32> -> vector<16x128xf32>
    %17 = vector.broadcast %6 : vector<1x128xf32> to vector<16x128xf32>
    %18 = arith.addf %16, %17 : vector<16x128xf32>
    %cst_31 = arith.constant 0.000000e+00 : f32
    %19 = vector.broadcast %cst_31 : f32 to vector<16x128xf32>
    %20 = arith.maximumf %18, %19 : vector<16x128xf32>
    %21 = vector.shape_cast %20 : vector<16x128xf32> to vector<2x8x128xf32>
    %c0_32 = arith.constant 0 : index
    %c0_33 = arith.constant 0 : index
    %c0_34 = arith.constant 0 : index
    %22 = vector.load %arg4[%c0_32, %c0_33, %c0_34] : memref<2x384x128xf32, #tpu.memory_space<vmem>>, vector<1x384x128xf32>
    %23 = vector.shape_cast %22 : vector<1x384x128xf32> to vector<384x128xf32>
    %c0_35 = arith.constant 0 : index
    %c0_36 = arith.constant 0 : index
    %c0_37 = arith.constant 0 : index
    %24 = vector.load %arg5[%c0_35, %c0_36, %c0_37] : memref<2x1x128xf32, #tpu.memory_space<vmem>>, vector<1x1x128xf32>
    %25 = vector.shape_cast %24 : vector<1x1x128xf32> to vector<1x128xf32>
    %c0_38 = arith.constant 0 : index
    %c8_39 = arith.constant 8 : index
    %c0_40 = arith.constant 0 : index
    %26 = vector.load %arg11[%c0_38, %c8_39, %c0_40] : memref<2x16x128xf32, #tpu.memory_space<vmem>>, vector<2x8x128xf32>
    tpu.vector_store %arg11[%c0_38, %c8_39, %c0_40], %21 {strides = array<i32>} : memref<2x16x128xf32, #tpu.memory_space<vmem>>, vector<2x8x128xf32>,
    %c0_41 = arith.constant 0 : index
    %c6_42 = arith.constant 6 : index
    %c0_43 = arith.constant 0 : index
    %27 = vector.load %arg11[%c0_41, %c6_42, %c0_43] : memref<2x16x128xf32, #tpu.memory_space<vmem>>, vector<2x8x128xf32>
    %c0_44 = arith.constant 0 : index
    %c0_45 = arith.constant 0 : index
    %c0_46 = arith.constant 0 : index
    %28 = vector.load %arg12[%c0_44, %c0_45, %c0_46] : memref<2x8x384xf32, #tpu.memory_space<vmem>>, vector<2x8x128xf32>
    tpu.vector_store %arg12[%c0_44, %c0_45, %c0_46], %27 {strides = array<i32>} : memref<2x8x384xf32, #tpu.memory_space<vmem>>, vector<2x8x128xf32>,
    %c0_47 = arith.constant 0 : index
    %c7_48 = arith.constant 7 : index
    %c0_49 = arith.constant 0 : index
    %29 = vector.load %arg11[%c0_47, %c7_48, %c0_49] : memref<2x16x128xf32, #tpu.memory_space<vmem>>, vector<2x8x128xf32>
    %c0_50 = arith.constant 0 : index
    %c0_51 = arith.constant 0 : index
    %c128_52 = arith.constant 128 : index
    %30 = vector.load %arg12[%c0_50, %c0_51, %c128_52] : memref<2x8x384xf32, #tpu.memory_space<vmem>>, vector<2x8x128xf32>
    tpu.vector_store %arg12[%c0_50, %c0_51, %c128_52], %29 {strides = array<i32>} : memref<2x8x384xf32, #tpu.memory_space<vmem>>, vector<2x8x128xf32>,
    %c0_53 = arith.constant 0 : index
    %c8_54 = arith.constant 8 : index
    %c0_55 = arith.constant 0 : index
    %31 = vector.load %arg11[%c0_53, %c8_54, %c0_55] : memref<2x16x128xf32, #tpu.memory_space<vmem>>, vector<2x8x128xf32>
    %c0_56 = arith.constant 0 : index
    %c0_57 = arith.constant 0 : index
    %c256_58 = arith.constant 256 : index
    %32 = vector.load %arg12[%c0_56, %c0_57, %c256_58] : memref<2x8x384xf32, #tpu.memory_space<vmem>>, vector<2x8x128xf32>
    tpu.vector_store %arg12[%c0_56, %c0_57, %c256_58], %31 {strides = array<i32>} : memref<2x8x384xf32, #tpu.memory_space<vmem>>, vector<2x8x128xf32>,
    %c0_59 = arith.constant 0 : index
    %c0_60 = arith.constant 0 : index
    %c0_61 = arith.constant 0 : index
    %33 = vector.load %arg12[%c0_59, %c0_60, %c0_61] : memref<2x8x384xf32, #tpu.memory_space<vmem>>, vector<2x8x384xf32>
    %34 = vector.shape_cast %33 : vector<2x8x384xf32> to vector<16x384xf32>
    %cst_62 = arith.constant dense<0.000000e+00> : vector<16x128xf32>
    %35 = tpu.matmul %34, %23, %cst_62 {dimension_numbers = #tpu.dot_dimension_numbers<[1], [0], [0], [1], [0, 0, 1, 1], [], []>} : vector<16x384xf32>, vector<384x128xf32>, vector<16x128xf32> -> vector<16x128xf32>
    %36 = vector.broadcast %25 : vector<1x128xf32> to vector<16x128xf32>
    %37 = arith.addf %35, %36 : vector<16x128xf32>
    %cst_63 = arith.constant 0.000000e+00 : f32
    %38 = vector.broadcast %cst_63 : f32 to vector<16x128xf32>
    %39 = arith.maximumf %37, %38 : vector<16x128xf32>
    %40 = vector.shape_cast %39 : vector<16x128xf32> to vector<2x8x128xf32>
    %41 = vector.shape_cast %2 : vector<2x8x128xf32> to vector<16x128xf32>
    %c0_64 = arith.constant 0 : index
    %c0_65 = arith.constant 0 : index
    %42 = vector.load %arg6[%c0_64, %c0_65] : memref<128x128xf32, #tpu.memory_space<vmem>>, vector<128x128xf32>
    %cst_66 = arith.constant dense<0.000000e+00> : vector<16x128xf32>
    %43 = tpu.matmul %41, %42, %cst_66 {dimension_numbers = #tpu.dot_dimension_numbers<[1], [0], [0], [1], [0, 0, 1, 1], [], []>} : vector<16x128xf32>, vector<128x128xf32>, vector<16x128xf32> -> vector<16x128xf32>
    %c0_67 = arith.constant 0 : index
    %c0_68 = arith.constant 0 : index
    %44 = vector.load %arg7[%c0_67, %c0_68] : memref<1x128xf32, #tpu.memory_space<vmem>>, vector<1x128xf32>
    %45 = vector.broadcast %44 : vector<1x128xf32> to vector<16x128xf32>
    %46 = arith.addf %43, %45 : vector<16x128xf32>
    %47 = vector.shape_cast %46 : vector<16x128xf32> to vector<2x8x128xf32>
    %48 = arith.addf %40, %47 : vector<2x8x128xf32>
    %cst_69 = arith.constant 0.000000e+00 : f32
    %49 = vector.broadcast %cst_69 : f32 to vector<2x8x128xf32>
    %50 = arith.maximumf %48, %49 : vector<2x8x128xf32>
    %c1 = arith.constant 1 : index
    %c0_70 = arith.constant 0 : index
    %c0_71 = arith.constant 0 : index
    %51 = vector.load %arg2[%c1, %c0_70, %c0_71] : memref<2x384x128xf32, #tpu.memory_space<vmem>>, vector<1x384x128xf32>
    %52 = vector.shape_cast %51 : vector<1x384x128xf32> to vector<384x128xf32>
    %c1_72 = arith.constant 1 : index
    %c0_73 = arith.constant 0 : index
    %c0_74 = arith.constant 0 : index
    %53 = vector.load %arg3[%c1_72, %c0_73, %c0_74] : memref<2x1x128xf32, #tpu.memory_space<vmem>>, vector<1x1x128xf32>
    %54 = vector.shape_cast %53 : vector<1x1x128xf32> to vector<1x128xf32>
    %c0_75 = arith.constant 0 : index
    %c8_76 = arith.constant 8 : index
    %c0_77 = arith.constant 0 : index
    %55 = vector.load %arg11[%c0_75, %c8_76, %c0_77] : memref<2x16x128xf32, #tpu.memory_space<vmem>>, vector<2x8x128xf32>
    tpu.vector_store %arg11[%c0_75, %c8_76, %c0_77], %50 {strides = array<i32>} : memref<2x16x128xf32, #tpu.memory_space<vmem>>, vector<2x8x128xf32>,
    %c0_78 = arith.constant 0 : index
    %c4 = arith.constant 4 : index
    %c0_79 = arith.constant 0 : index
    %56 = vector.load %arg11[%c0_78, %c4, %c0_79] : memref<2x16x128xf32, #tpu.memory_space<vmem>>, vector<2x8x128xf32>
    %c0_80 = arith.constant 0 : index
    %c0_81 = arith.constant 0 : index
    %c0_82 = arith.constant 0 : index
    %57 = vector.load %arg12[%c0_80, %c0_81, %c0_82] : memref<2x8x384xf32, #tpu.memory_space<vmem>>, vector<2x8x128xf32>
    tpu.vector_store %arg12[%c0_80, %c0_81, %c0_82], %56 {strides = array<i32>} : memref<2x8x384xf32, #tpu.memory_space<vmem>>, vector<2x8x128xf32>,
    %c0_83 = arith.constant 0 : index
    %c6_84 = arith.constant 6 : index
    %c0_85 = arith.constant 0 : index
    %58 = vector.load %arg11[%c0_83, %c6_84, %c0_85] : memref<2x16x128xf32, #tpu.memory_space<vmem>>, vector<2x8x128xf32>
    %c0_86 = arith.constant 0 : index
    %c0_87 = arith.constant 0 : index
    %c128_88 = arith.constant 128 : index
    %59 = vector.load %arg12[%c0_86, %c0_87, %c128_88] : memref<2x8x384xf32, #tpu.memory_space<vmem>>, vector<2x8x128xf32>
    tpu.vector_store %arg12[%c0_86, %c0_87, %c128_88], %58 {strides = array<i32>} : memref<2x8x384xf32, #tpu.memory_space<vmem>>, vector<2x8x128xf32>,
    %c0_89 = arith.constant 0 : index
    %c8_90 = arith.constant 8 : index
    %c0_91 = arith.constant 0 : index
    %60 = vector.load %arg11[%c0_89, %c8_90, %c0_91] : memref<2x16x128xf32, #tpu.memory_space<vmem>>, vector<2x8x128xf32>
    %c0_92 = arith.constant 0 : index
    %c0_93 = arith.constant 0 : index
    %c256_94 = arith.constant 256 : index
    %61 = vector.load %arg12[%c0_92, %c0_93, %c256_94] : memref<2x8x384xf32, #tpu.memory_space<vmem>>, vector<2x8x128xf32>
    tpu.vector_store %arg12[%c0_92, %c0_93, %c256_94], %60 {strides = array<i32>} : memref<2x8x384xf32, #tpu.memory_space<vmem>>, vector<2x8x128xf32>,
    %c0_95 = arith.constant 0 : index
    %c0_96 = arith.constant 0 : index
    %c0_97 = arith.constant 0 : index
    %62 = vector.load %arg12[%c0_95, %c0_96, %c0_97] : memref<2x8x384xf32, #tpu.memory_space<vmem>>, vector<2x8x384xf32>
    %63 = vector.shape_cast %62 : vector<2x8x384xf32> to vector<16x384xf32>
    %cst_98 = arith.constant dense<0.000000e+00> : vector<16x128xf32>
    %64 = tpu.matmul %63, %52, %cst_98 {dimension_numbers = #tpu.dot_dimension_numbers<[1], [0], [0], [1], [0, 0, 1, 1], [], []>} : vector<16x384xf32>, vector<384x128xf32>, vector<16x128xf32> -> vector<16x128xf32>
    %65 = vector.broadcast %54 : vector<1x128xf32> to vector<16x128xf32>
    %66 = arith.addf %64, %65 : vector<16x128xf32>
    %cst_99 = arith.constant 0.000000e+00 : f32
    %67 = vector.broadcast %cst_99 : f32 to vector<16x128xf32>
    %68 = arith.maximumf %66, %67 : vector<16x128xf32>
    %69 = vector.shape_cast %68 : vector<16x128xf32> to vector<2x8x128xf32>
    %c1_100 = arith.constant 1 : index
    %c0_101 = arith.constant 0 : index
    %c0_102 = arith.constant 0 : index
    %70 = vector.load %arg4[%c1_100, %c0_101, %c0_102] : memref<2x384x128xf32, #tpu.memory_space<vmem>>, vector<1x384x128xf32>
    %71 = vector.shape_cast %70 : vector<1x384x128xf32> to vector<384x128xf32>
    %c1_103 = arith.constant 1 : index
    %c0_104 = arith.constant 0 : index
    %c0_105 = arith.constant 0 : index
    %72 = vector.load %arg5[%c1_103, %c0_104, %c0_105] : memref<2x1x128xf32, #tpu.memory_space<vmem>>, vector<1x1x128xf32>
    %73 = vector.shape_cast %72 : vector<1x1x128xf32> to vector<1x128xf32>
    %c0_106 = arith.constant 0 : index
    %c8_107 = arith.constant 8 : index
    %c0_108 = arith.constant 0 : index
    %74 = vector.load %arg11[%c0_106, %c8_107, %c0_108] : memref<2x16x128xf32, #tpu.memory_space<vmem>>, vector<2x8x128xf32>
    tpu.vector_store %arg11[%c0_106, %c8_107, %c0_108], %69 {strides = array<i32>} : memref<2x16x128xf32, #tpu.memory_space<vmem>>, vector<2x8x128xf32>,
    %c0_109 = arith.constant 0 : index
    %c4_110 = arith.constant 4 : index
    %c0_111 = arith.constant 0 : index
    %75 = vector.load %arg11[%c0_109, %c4_110, %c0_111] : memref<2x16x128xf32, #tpu.memory_space<vmem>>, vector<2x8x128xf32>
    %c0_112 = arith.constant 0 : index
    %c0_113 = arith.constant 0 : index
    %c0_114 = arith.constant 0 : index
    %76 = vector.load %arg12[%c0_112, %c0_113, %c0_114] : memref<2x8x384xf32, #tpu.memory_space<vmem>>, vector<2x8x128xf32>
    tpu.vector_store %arg12[%c0_112, %c0_113, %c0_114], %75 {strides = array<i32>} : memref<2x8x384xf32, #tpu.memory_space<vmem>>, vector<2x8x128xf32>,
    %c0_115 = arith.constant 0 : index
    %c6_116 = arith.constant 6 : index
    %c0_117 = arith.constant 0 : index
    %77 = vector.load %arg11[%c0_115, %c6_116, %c0_117] : memref<2x16x128xf32, #tpu.memory_space<vmem>>, vector<2x8x128xf32>
    %c0_118 = arith.constant 0 : index
    %c0_119 = arith.constant 0 : index
    %c128_120 = arith.constant 128 : index
    %78 = vector.load %arg12[%c0_118, %c0_119, %c128_120] : memref<2x8x384xf32, #tpu.memory_space<vmem>>, vector<2x8x128xf32>
    tpu.vector_store %arg12[%c0_118, %c0_119, %c128_120], %77 {strides = array<i32>} : memref<2x8x384xf32, #tpu.memory_space<vmem>>, vector<2x8x128xf32>,
    %c0_121 = arith.constant 0 : index
    %c8_122 = arith.constant 8 : index
    %c0_123 = arith.constant 0 : index
    %79 = vector.load %arg11[%c0_121, %c8_122, %c0_123] : memref<2x16x128xf32, #tpu.memory_space<vmem>>, vector<2x8x128xf32>
    %c0_124 = arith.constant 0 : index
    %c0_125 = arith.constant 0 : index
    %c256_126 = arith.constant 256 : index
    %80 = vector.load %arg12[%c0_124, %c0_125, %c256_126] : memref<2x8x384xf32, #tpu.memory_space<vmem>>, vector<2x8x128xf32>
    tpu.vector_store %arg12[%c0_124, %c0_125, %c256_126], %79 {strides = array<i32>} : memref<2x8x384xf32, #tpu.memory_space<vmem>>, vector<2x8x128xf32>,
    %c0_127 = arith.constant 0 : index
    %c0_128 = arith.constant 0 : index
    %c0_129 = arith.constant 0 : index
    %81 = vector.load %arg12[%c0_127, %c0_128, %c0_129] : memref<2x8x384xf32, #tpu.memory_space<vmem>>, vector<2x8x384xf32>
    %82 = vector.shape_cast %81 : vector<2x8x384xf32> to vector<16x384xf32>
    %cst_130 = arith.constant dense<0.000000e+00> : vector<16x128xf32>
    %83 = tpu.matmul %82, %71, %cst_130 {dimension_numbers = #tpu.dot_dimension_numbers<[1], [0], [0], [1], [0, 0, 1, 1], [], []>} : vector<16x384xf32>, vector<384x128xf32>, vector<16x128xf32> -> vector<16x128xf32>
    %84 = vector.broadcast %73 : vector<1x128xf32> to vector<16x128xf32>
    %85 = arith.addf %83, %84 : vector<16x128xf32>
    %cst_131 = arith.constant 0.000000e+00 : f32
    %86 = vector.broadcast %cst_131 : f32 to vector<16x128xf32>
    %87 = arith.maximumf %85, %86 : vector<16x128xf32>
    %88 = vector.shape_cast %87 : vector<16x128xf32> to vector<2x8x128xf32>
    %89 = arith.addf %88, %50 : vector<2x8x128xf32>
    %cst_132 = arith.constant 0.000000e+00 : f32
    %90 = vector.broadcast %cst_132 : f32 to vector<2x8x128xf32>
    %91 = arith.maximumf %89, %90 : vector<2x8x128xf32>
    %92 = vector.extract_strided_slice %91 {offsets = [0, 7, 0], sizes = [2, 1, 128], strides = [1, 1, 1]} : vector<2x8x128xf32> to vector<2x1x128xf32>
    %93 = vector.shape_cast %92 : vector<2x1x128xf32> to vector<2x128xf32>
    %c0_133 = arith.constant 0 : index
    %c0_134 = arith.constant 0 : index
    %94 = vector.load %arg8[%c0_133, %c0_134] : memref<128x128xf32, #tpu.memory_space<vmem>>, vector<128x128xf32>
    %cst_135 = arith.constant dense<0.000000e+00> : vector<2x128xf32>
    %95 = tpu.matmul %93, %94, %cst_135 {dimension_numbers = #tpu.dot_dimension_numbers<[1], [0], [0], [1], [0, 0, 1, 1], [], []>} : vector<2x128xf32>, vector<128x128xf32>, vector<2x128xf32> -> vector<2x128xf32>
    %c0_136 = arith.constant 0 : index
    %c0_137 = arith.constant 0 : index
    %96 = vector.load %arg9[%c0_136, %c0_137] : memref<1x128xf32, #tpu.memory_space<vmem>>, vector<1x128xf32>
    %97 = vector.broadcast %96 : vector<1x128xf32> to vector<2x128xf32>
    %98 = arith.addf %95, %97 : vector<2x128xf32>
    %c0_138 = arith.constant 0 : index
    %c0_139 = arith.constant 0 : index
    %99 = vector.load %arg10[%c0_138, %c0_139] : memref<2x128xf32, #tpu.memory_space<vmem>>, vector<2x128xf32>
    tpu.vector_store %arg10[%c0_138, %c0_139], %98 {strides = array<i32>} : memref<2x128xf32, #tpu.memory_space<vmem>>, vector<2x128xf32>,
    return
  }
  func.func @transform_0(%arg0: i32) -> (i32, i32, i32) {
    %c0_i32 = arith.constant 0 : i32
    %c0_i32_0 = arith.constant 0 : i32
    %c0_i32_1 = arith.constant 0 : i32
    return %arg0, %c0_i32, %c0_i32_0 : i32, i32, i32
  }
  func.func @transform_1(%arg0: i32) -> (i32, i32, i32) {
    %c0_i32 = arith.constant 0 : i32
    %c0_i32_0 = arith.constant 0 : i32
    %c0_i32_1 = arith.constant 0 : i32
    %c0_i32_2 = arith.constant 0 : i32
    return %c0_i32, %c0_i32_0, %c0_i32_1 : i32, i32, i32
  }
  func.func @transform_2(%arg0: i32) -> (i32, i32, i32) {
    %c0_i32 = arith.constant 0 : i32
    %c0_i32_0 = arith.constant 0 : i32
    %c0_i32_1 = arith.constant 0 : i32
    %c0_i32_2 = arith.constant 0 : i32
    return %c0_i32, %c0_i32_0, %c0_i32_1 : i32, i32, i32
  }
  func.func @transform_3(%arg0: i32) -> (i32, i32, i32) {
    %c0_i32 = arith.constant 0 : i32
    %c0_i32_0 = arith.constant 0 : i32
    %c0_i32_1 = arith.constant 0 : i32
    %c0_i32_2 = arith.constant 0 : i32
    return %c0_i32, %c0_i32_0, %c0_i32_1 : i32, i32, i32
  }
  func.func @transform_4(%arg0: i32) -> (i32, i32, i32) {
    %c0_i32 = arith.constant 0 : i32
    %c0_i32_0 = arith.constant 0 : i32
    %c0_i32_1 = arith.constant 0 : i32
    %c0_i32_2 = arith.constant 0 : i32
    return %c0_i32, %c0_i32_0, %c0_i32_1 : i32, i32, i32
  }
  func.func @transform_5(%arg0: i32) -> (i32, i32) {
    %c0_i32 = arith.constant 0 : i32
    %c0_i32_0 = arith.constant 0 : i32
    %c0_i32_1 = arith.constant 0 : i32
    return %c0_i32, %c0_i32_0 : i32, i32
  }
  func.func @transform_6(%arg0: i32) -> (i32, i32) {
    %c0_i32 = arith.constant 0 : i32
    %c0_i32_0 = arith.constant 0 : i32
    %c0_i32_1 = arith.constant 0 : i32
    return %c0_i32, %c0_i32_0 : i32, i32
  }
  func.func @transform_7(%arg0: i32) -> (i32, i32) {
    %c0_i32 = arith.constant 0 : i32
    %c0_i32_0 = arith.constant 0 : i32
    %c0_i32_1 = arith.constant 0 : i32
    return %c0_i32, %c0_i32_0 : i32, i32
  }
  func.func @transform_8(%arg0: i32) -> (i32, i32) {
    %c0_i32 = arith.constant 0 : i32
    %c0_i32_0 = arith.constant 0 : i32
    %c0_i32_1 = arith.constant 0 : i32
    return %c0_i32, %c0_i32_0 : i32, i32
  }
  func.func @transform_9(%arg0: i32) -> (i32, i32) {
    %c0_i32 = arith.constant 0 : i32
    %c0_i32_0 = arith.constant 0 : i32
    return %arg0, %c0_i32 : i32, i32
  }
}

</mosaic_0001>

<llo_original>
// kernel: tpu_custom_call.1
$region0: #{tpu_custom_call.1}
  #allocation0 [shape = 'u32[]', space=smem, size = 0x4, offset = 0x4, fixed_abs, tag = 'smem constant byte address 0x4 - core index']
  #allocation1 [shape = 'u32[144,128]{1,0:T(1,128)}', space=vmem, size = 0x12000, scoped, tag = 'internal scratch']
  #allocation2 [shape = 'f32[2,16,128]{2,1,0:T(8,128)}', space=vmem, size = 0x4000, scoped, tag = 'scratch operand']
  #allocation3 [shape = 'f32[2,8,384]{2,1,0:T(8,128)}', space=vmem, size = 0x6000, scoped, tag = 'scratch operand']
  %s0 = inlined_call_operand.hbm [shape: f32[2,8,128], index: 0, kind: input, shape index: {}]
  %s1 = inlined_call_operand.hbm [shape: f32[2,384,128], index: 1, kind: input, shape index: {}]
  %s2 = inlined_call_operand.vmem [shape: f32[2,1,128], index: 2, kind: input, shape index: {}]
  %s3 = inlined_call_operand.hbm [shape: f32[2,384,128], index: 3, kind: input, shape index: {}]
  %s4 = inlined_call_operand.vmem [shape: f32[2,1,128], index: 4, kind: input, shape index: {}]
  %s5 = inlined_call_operand.hbm [shape: f32[128,128], index: 5, kind: input, shape index: {}]
  %s6 = inlined_call_operand.vmem [shape: f32[1,128], index: 6, kind: input, shape index: {}]
  %s7 = inlined_call_operand.hbm [shape: f32[128,128], index: 7, kind: input, shape index: {}]
  %s8 = inlined_call_operand.vmem [shape: f32[1,128], index: 8, kind: input, shape index: {}]
  %s9 = inlined_call_operand.hbm [shape: f32[2,128], index: 9, kind: output, shape index: {}]
  %s10 = sld [smem:[#allocation0]]
  $region66: #{tpu_custom_call.1} parent=0
    _
  %s12 = ssub.s32 1, %s10
  %s13 = scalar_select 0, %s12, %s10
  $region1: #{tpu_custom_call.1} parent=0
    #allocation4 [shape = 'u8[8192]{0}', space=vmem, size = 0x2000, scoped, tag = 'input window, operand 0, single buffered']
    #allocation5 [shape = 's32[1]{0}', space=sflag, size = 0x4, scoped, tag = 'scoped memory for tpu_custom_call.1']
    #allocation6 [shape = 's32[1]{0}', space=sflag, size = 0x4, scoped, tag = 'scoped memory for tpu_custom_call.1']
    #allocation7 [shape = 'u8[393216]{0}', space=vmem, size = 0x60000, scoped, tag = 'input window, operand 1, single buffered']
    #allocation8 [shape = 's32[1]{0}', space=sflag, size = 0x4, scoped, tag = 'scoped memory for tpu_custom_call.1']
    #allocation9 [shape = 'u8[393216]{0}', space=vmem, size = 0x60000, scoped, tag = 'input window, operand 3, single buffered']
    #allocation10 [shape = 'u8[65536]{0}', space=vmem, size = 0x10000, scoped, tag = 'input window, operand 5, single buffered']
    #allocation11 [shape = 's32[1]{0}', space=sflag, size = 0x4, scoped, tag = 'scoped memory for tpu_custom_call.1']
    #allocation12 [shape = 'u8[65536]{0}', space=vmem, size = 0x10000, scoped, tag = 'input window, operand 7, single buffered']
    #allocation13 [shape = 'u8[1024]{0}', space=vmem, size = 0x400, scoped, tag = 'output window, operand 0, single buffered']
    %14 = vsyncpa [#allocation5], 0
    %15 = vsyncpa [#allocation8], 0
    %16 = vsyncpa [#allocation11], 0
    %17 = vsyncpa [#allocation6], 0
    // Predicated region
    $region2: #{tpu_custom_call.1} parent=1 // pred_check
      _
    $region3: #{tpu_custom_call.1} parent=1 // pred_check_branch
      %19 = sbr.rel (0) target = $region5
    $region4: #{tpu_custom_call.1} parent=1 // pred_region
      %s21 = ssub.s32 256, 256
      %22 = vsyncadd [#allocation5], %s21
      %s23 = sshll.u32 [#allocation4], 4
      %s24 = int_to_ptr.vmem [resolvable:$true] %s23
      %29 = dma.hbm_to_vmem [thread:$0]  %s0, 256, %s24, [#allocation5], 128, 128, 8
    $region5: #{tpu_custom_call.1} parent=1 // pred_fallthru
      _
    // Predicated region
    $region6: #{tpu_custom_call.1} parent=1 // pred_check
      _
    $region7: #{tpu_custom_call.1} parent=1 // pred_check_branch
      %31 = sbr.rel (0) target = $region9
    $region8: #{tpu_custom_call.1} parent=1 // pred_region
      %s33 = ssub.s32 12288, 12288
      %34 = vsyncadd [#allocation8], %s33
      %s35 = sshll.u32 [#allocation7], 4
      %s36 = int_to_ptr.vmem [resolvable:$true] %s35
      %41 = dma.hbm_to_vmem [thread:$0]  %s1, 12288, %s36, [#allocation8], 128, 128, 8
    $region9: #{tpu_custom_call.1} parent=1 // pred_fallthru
      _
    // Predicated region
    $region10: #{tpu_custom_call.1} parent=1 // pred_check
      _
    $region11: #{tpu_custom_call.1} parent=1 // pred_check_branch
      %43 = sbr.rel (0) target = $region13
    $region12: #{tpu_custom_call.1} parent=1 // pred_region
      _
    $region13: #{tpu_custom_call.1} parent=1 // pred_fallthru
      _
    // Predicated region
    $region14: #{tpu_custom_call.1} parent=1 // pred_check
      _
    $region15: #{tpu_custom_call.1} parent=1 // pred_check_branch
      %45 = sbr.rel (0) target = $region17
    $region16: #{tpu_custom_call.1} parent=1 // pred_region
      %s47 = ssub.s32 12288, 12288
      %48 = vsyncadd [#allocation8], %s47
      %s49 = sshll.u32 [#allocation9], 4
      %s50 = int_to_ptr.vmem [resolvable:$true] %s49
      %55 = dma.hbm_to_vmem [thread:$0]  %s3, 12288, %s50, [#allocation8], 128, 128, 8
    $region17: #{tpu_custom_call.1} parent=1 // pred_fallthru
      _
    // Predicated region
    $region18: #{tpu_custom_call.1} parent=1 // pred_check
      _
    $region19: #{tpu_custom_call.1} parent=1 // pred_check_branch
      %57 = sbr.rel (0) target = $region21
    $region20: #{tpu_custom_call.1} parent=1 // pred_region
      _
    $region21: #{tpu_custom_call.1} parent=1 // pred_fallthru
      _
    // Predicated region
    $region22: #{tpu_custom_call.1} parent=1 // pred_check
      _
    $region23: #{tpu_custom_call.1} parent=1 // pred_check_branch
      %59 = sbr.rel (0) target = $region25
    $region24: #{tpu_custom_call.1} parent=1 // pred_region
      %s61 = ssub.s32 2048, 2048
      %62 = vsyncadd [#allocation11], %s61
      %s63 = sshll.u32 [#allocation10], 4
      %s64 = int_to_ptr.vmem [resolvable:$true] %s63
      %69 = dma.hbm_to_vmem [thread:$0]  %s5, 2048, %s64, [#allocation11], 128, 128, 8
    $region25: #{tpu_custom_call.1} parent=1 // pred_fallthru
      _
    // Predicated region
    $region26: #{tpu_custom_call.1} parent=1 // pred_check
      _
    $region27: #{tpu_custom_call.1} parent=1 // pred_check_branch
      %71 = sbr.rel (0) target = $region29
    $region28: #{tpu_custom_call.1} parent=1 // pred_region
      _
    $region29: #{tpu_custom_call.1} parent=1 // pred_fallthru
      _
    // Predicated region
    $region30: #{tpu_custom_call.1} parent=1 // pred_check
      _
    $region31: #{tpu_custom_call.1} parent=1 // pred_check_branch
      %73 = sbr.rel (0) target = $region33
    $region32: #{tpu_custom_call.1} parent=1 // pred_region
      %s75 = ssub.s32 2048, 2048
      %76 = vsyncadd [#allocation11], %s75
      %s77 = sshll.u32 [#allocation12], 4
      %s78 = int_to_ptr.vmem [resolvable:$true] %s77
      %83 = dma.hbm_to_vmem [thread:$0]  %s7, 2048, %s78, [#allocation11], 128, 128, 8
    $region33: #{tpu_custom_call.1} parent=1 // pred_fallthru
      _
    // Predicated region
    $region34: #{tpu_custom_call.1} parent=1 // pred_check
      _
    $region35: #{tpu_custom_call.1} parent=1 // pred_check_branch
      %85 = sbr.rel (0) target = $region37
    $region36: #{tpu_custom_call.1} parent=1 // pred_region
      _
    $region37: #{tpu_custom_call.1} parent=1 // pred_fallthru
      _
    // Predicated region
    $region38: #{tpu_custom_call.1} parent=1 // pred_check
      _
    $region39: #{tpu_custom_call.1} parent=1 // pred_check_branch
      %87 = sbr.rel (0) target = $region41
    $region40: #{tpu_custom_call.1} parent=1 // pred_region
      %88 = dma.done [#allocation5], 256
    $region41: #{tpu_custom_call.1} parent=1 // pred_fallthru
      _
    // Predicated region
    $region42: #{tpu_custom_call.1} parent=1 // pred_check
      _
    $region43: #{tpu_custom_call.1} parent=1 // pred_check_branch
      %90 = sbr.rel (0) target = $region45
    $region44: #{tpu_custom_call.1} parent=1 // pred_region
      %91 = dma.done [#allocation8], 12288
    $region45: #{tpu_custom_call.1} parent=1 // pred_fallthru
      _
    // Predicated region
    $region46: #{tpu_custom_call.1} parent=1 // pred_check
      _
    $region47: #{tpu_custom_call.1} parent=1 // pred_check_branch
      %93 = sbr.rel (0) target = $region49
    $region48: #{tpu_custom_call.1} parent=1 // pred_region
      %94 = dma.done [#allocation8], 12288
    $region49: #{tpu_custom_call.1} parent=1 // pred_fallthru
      _
    // Predicated region
    $region50: #{tpu_custom_call.1} parent=1 // pred_check
      _
    $region51: #{tpu_custom_call.1} parent=1 // pred_check_branch
      %96 = sbr.rel (0) target = $region53
    $region52: #{tpu_custom_call.1} parent=1 // pred_region
      %97 = dma.done [#allocation11], 2048
    $region53: #{tpu_custom_call.1} parent=1 // pred_fallthru
      _
    // Predicated region
    $region54: #{tpu_custom_call.1} parent=1 // pred_check
      _
    $region55: #{tpu_custom_call.1} parent=1 // pred_check_branch
      %99 = sbr.rel (0) target = $region57
    $region56: #{tpu_custom_call.1} parent=1 // pred_region
      %100 = dma.done [#allocation11], 2048
    $region57: #{tpu_custom_call.1} parent=1 // pred_fallthru
      _
    %101 = vst [vmem:[#allocation2] sm:$0xff] 0.0
    %102 = vst [vmem:[#allocation2 + $0x10] sm:$0xff] 0.0
    %v103 = vld [vmem:[#allocation4] sm:$0xff]
    %v104 = vld [vmem:[#allocation4 + $0x8] sm:$0xff]
    %v105 = vld [vmem:[#allocation7] sm:$0xff]
    %v106 = vld [vmem:[#allocation7 + $0x8] sm:$0xff]
    %v107 = vld [vmem:[#allocation7 + $0x10] sm:$0xff]
    %v108 = vld [vmem:[#allocation7 + $0x18] sm:$0xff]
    %v109 = vld [vmem:[#allocation7 + $0x20] sm:$0xff]
    %v110 = vld [vmem:[#allocation7 + $0x28] sm:$0xff]
    %v111 = vld [vmem:[#allocation7 + $0x30] sm:$0xff]
    %v112 = vld [vmem:[#allocation7 + $0x38] sm:$0xff]
    %v113 = vld [vmem:[#allocation7 + $0x40] sm:$0xff]
    %v114 = vld [vmem:[#allocation7 + $0x48] sm:$0xff]
    %v115 = vld [vmem:[#allocation7 + $0x50] sm:$0xff]
    %v116 = vld [vmem:[#allocation7 + $0x58] sm:$0xff]
    %v117 = vld [vmem:[#allocation7 + $0x60] sm:$0xff]
    %v118 = vld [vmem:[#allocation7 + $0x68] sm:$0xff]
    %v119 = vld [vmem:[#allocation7 + $0x70] sm:$0xff]
    %v120 = vld [vmem:[#allocation7 + $0x78] sm:$0xff]
    %v121 = vld [vmem:[#allocation7 + $0x80] sm:$0xff]
    %v122 = vld [vmem:[#allocation7 + $0x88] sm:$0xff]
    %v123 = vld [vmem:[#allocation7 + $0x90] sm:$0xff]
    %v124 = vld [vmem:[#allocation7 + $0x98] sm:$0xff]
    %v125 = vld [vmem:[#allocation7 + $0xa0] sm:$0xff]
    %v126 = vld [vmem:[#allocation7 + $0xa8] sm:$0xff]
    %v127 = vld [vmem:[#allocation7 + $0xb0] sm:$0xff]
    %v128 = vld [vmem:[#allocation7 + $0xb8] sm:$0xff]
    %v129 = vld [vmem:[#allocation7 + $0xc0] sm:$0xff]
    %v130 = vld [vmem:[#allocation7 + $0xc8] sm:$0xff]
    %v131 = vld [vmem:[#allocation7 + $0xd0] sm:$0xff]
    %v132 = vld [vmem:[#allocation7 + $0xd8] sm:$0xff]
    %v133 = vld [vmem:[#allocation7 + $0xe0] sm:$0xff]
    %v134 = vld [vmem:[#allocation7 + $0xe8] sm:$0xff]
    %v135 = vld [vmem:[#allocation7 + $0xf0] sm:$0xff]
    %v136 = vld [vmem:[#allocation7 + $0xf8] sm:$0xff]
    %v137 = vld [vmem:[#allocation7 + $0x100] sm:$0xff]
    %v138 = vld [vmem:[#allocation7 + $0x108] sm:$0xff]
    %v139 = vld [vmem:[#allocation7 + $0x110] sm:$0xff]
    %v140 = vld [vmem:[#allocation7 + $0x118] sm:$0xff]
    %v141 = vld [vmem:[#allocation7 + $0x120] sm:$0xff]
    %v142 = vld [vmem:[#allocation7 + $0x128] sm:$0xff]
    %v143 = vld [vmem:[#allocation7 + $0x130] sm:$0xff]
    %v144 = vld [vmem:[#allocation7 + $0x138] sm:$0xff]
    %v145 = vld [vmem:[#allocation7 + $0x140] sm:$0xff]
    %v146 = vld [vmem:[#allocation7 + $0x148] sm:$0xff]
    %v147 = vld [vmem:[#allocation7 + $0x150] sm:$0xff]
    %v148 = vld [vmem:[#allocation7 + $0x158] sm:$0xff]
    %v149 = vld [vmem:[#allocation7 + $0x160] sm:$0xff]
    %v150 = vld [vmem:[#allocation7 + $0x168] sm:$0xff]
    %v151 = vld [vmem:[#allocation7 + $0x170] sm:$0xff]
    %v152 = vld [vmem:[#allocation7 + $0x178] sm:$0xff]
    %v153 = vld [vmem:[%s2] sm:$0x1]
    %154 = vst [vmem:[#allocation2 + $0x8] sm:$0xff] %v103
    %155 = vst [vmem:[#allocation2 + $0x18] sm:$0xff] %v104
    %v156 = vld [vmem:[#allocation2 + $0x6] sm:$0xff]
    %v157 = vld [vmem:[#allocation2 + $0x16] sm:$0xff]
    %158 = vst [vmem:[#allocation3] sm:$0xff] %v156
    %159 = vst [vmem:[#allocation3 + $0x18] sm:$0xff] %v157
    %v160 = vld [vmem:[#allocation2 + $0x7] sm:$0xff]
    %v161 = vld [vmem:[#allocation2 + $0x17] sm:$0xff]
    %162 = vst [vmem:[#allocation3 + $0x8] sm:$0xff] %v160
    %163 = vst [vmem:[#allocation3 + $0x20] sm:$0xff] %v161
    %v164 = vld [vmem:[#allocation2 + $0x8] sm:$0xff]
    %v165 = vld [vmem:[#allocation2 + $0x18] sm:$0xff]
    %166 = vst [vmem:[#allocation3 + $0x10] sm:$0xff] %v164
    %167 = vst [vmem:[#allocation3 + $0x28] sm:$0xff] %v165
    %v168 = vld [vmem:[#allocation3] sm:$0xff]
    %v169 = vld [vmem:[#allocation3 + $0x8] sm:$0xff]
    %v170 = vld [vmem:[#allocation3 + $0x10] sm:$0xff]
    %v171 = vld [vmem:[#allocation3 + $0x18] sm:$0xff]
    %v172 = vld [vmem:[#allocation3 + $0x20] sm:$0xff]
    %v173 = vld [vmem:[#allocation3 + $0x28] sm:$0xff]
    %v175 = vlaneseq
    %v176 = vshrl.u32 %v175, 7
    %v177 = vsub.s32 0, %v176
    %v178 = vrot.slane %v153, %v177
    %180 = vmatprep.subr.mxu0 0.0
    %181 = vmatpush1.msra.mxu0 %v105
    %182 = vmatprep.subr.mxu0 0.0
    %183 = vmatpush1.msra.mxu0 %v106
    %184 = vmatprep.subr.mxu0 0.0
    %185 = vmatpush1.msra.mxu0 %v107
    %186 = vmatprep.subr.mxu0 0.0
    %187 = vmatpush1.msra.mxu0 %v108
    %188 = vmatprep.subr.mxu0 0.0
    %189 = vmatpush1.msra.mxu0 %v109
    %190 = vmatprep.subr.mxu0 0.0
    %191 = vmatpush1.msra.mxu0 %v110
    %192 = vmatprep.subr.mxu0 0.0
    %193 = vmatpush1.msra.mxu0 %v111
    %194 = vmatprep.subr.mxu0 0.0
    %195 = vmatpush1.msra.mxu0 %v112
    %196 = vmatprep.subr.mxu0 0.0
    %197 = vmatpush1.msra.mxu0 %v113
    %198 = vmatprep.subr.mxu0 0.0
    %199 = vmatpush1.msra.mxu0 %v114
    %200 = vmatprep.subr.mxu0 0.0
    %201 = vmatpush1.msra.mxu0 %v115
    %202 = vmatprep.subr.mxu0 0.0
    %203 = vmatpush1.msra.mxu0 %v116
    %204 = vmatprep.subr.mxu0 0.0
    %205 = vmatpush1.msra.mxu0 %v117
    %206 = vmatprep.subr.mxu0 0.0
    %207 = vmatpush1.msra.mxu0 %v118
    %208 = vmatprep.subr.mxu0 0.0
    %209 = vmatpush1.msra.mxu0 %v119
    %210 = vmatprep.subr.mxu0 0.0
    %211 = vmatpush1.msra.mxu0 %v120
    %212 = vmatprep.subr.mxu0 0.0
    %213 = vmatpush1.msra.mxu0 %v121
    %214 = vmatprep.subr.mxu0 0.0
    %215 = vmatpush1.msra.mxu0 %v122
    %216 = vmatprep.subr.mxu0 0.0
    %217 = vmatpush1.msra.mxu0 %v123
    %218 = vmatprep.subr.mxu0 0.0
    %219 = vmatpush1.msra.mxu0 %v124
    %220 = vmatprep.subr.mxu0 0.0
    %221 = vmatpush1.msra.mxu0 %v125
    %222 = vmatprep.subr.mxu0 0.0
    %223 = vmatpush1.msra.mxu0 %v126
    %224 = vmatprep.subr.mxu0 0.0
    %225 = vmatpush1.msra.mxu0 %v127
    %226 = vmatprep.subr.mxu0 0.0
    %227 = vmatpush1.msra.mxu0 %v128
    %228 = vmatprep.subr.mxu0 0.0
    %229 = vmatpush1.msra.mxu0 %v129
    %230 = vmatprep.subr.mxu0 0.0
    %231 = vmatpush1.msra.mxu0 %v130
    %232 = vmatprep.subr.mxu0 0.0
    %233 = vmatpush1.msra.mxu0 %v131
    %234 = vmatprep.subr.mxu0 0.0
    %235 = vmatpush1.msra.mxu0 %v132
    %236 = vmatprep.subr.mxu0 0.0
    %237 = vmatpush1.msra.mxu0 %v133
    %238 = vmatprep.subr.mxu0 0.0
    %239 = vmatpush1.msra.mxu0 %v134
    %240 = vmatprep.subr.mxu0 0.0
    %241 = vmatpush1.msra.mxu0 %v135
    %242 = vmatprep.subr.mxu0 0.0
    %243 = vmatpush1.msra.mxu0 %v136
    %244 = vmatprep.mubr.f32.mxu0 %v169
    %245 = vmatmul.mubr.f32.gmra.mrb[0].mxu0 %v168
    %v246 = vpop.f32.mrb[0].mxu0
    %v247 = vadd.f32 %v178, %v246
    %v248 = vpop.f32.mrb[0].mxu0
    %249 = vmatprep.mubr.f32.mxu0 %v172
    %250 = vmatmul.mubr.f32.gmra.mrb[0].mxu0 %v171
    %v251 = vpop.f32.mrb[0].mxu0
    %v252 = vadd.f32 %v178, %v251
    %v253 = vpop.f32.mrb[0].mxu0
    %254 = vdwg.mxu0
    %255 = vmatprep.subr.mxu0 0.0
    %256 = vmatpush1.msra.mxu0 %v137
    %257 = vmatprep.subr.mxu0 0.0
    %258 = vmatpush1.msra.mxu0 %v138
    %259 = vmatprep.subr.mxu0 0.0
    %260 = vmatpush1.msra.mxu0 %v139
    %261 = vmatprep.subr.mxu0 0.0
    %262 = vmatpush1.msra.mxu0 %v140
    %263 = vmatprep.subr.mxu0 0.0
    %264 = vmatpush1.msra.mxu0 %v141
    %265 = vmatprep.subr.mxu0 0.0
    %266 = vmatpush1.msra.mxu0 %v142
    %267 = vmatprep.subr.mxu0 0.0
    %268 = vmatpush1.msra.mxu0 %v143
    %269 = vmatprep.subr.mxu0 0.0
    %270 = vmatpush1.msra.mxu0 %v144
    %271 = vmatprep.subr.mxu0 0.0
    %272 = vmatpush1.msra.mxu0 %v145
    %273 = vmatprep.subr.mxu0 0.0
    %274 = vmatpush1.msra.mxu0 %v146
    %275 = vmatprep.subr.mxu0 0.0
    %276 = vmatpush1.msra.mxu0 %v147
    %277 = vmatprep.subr.mxu0 0.0
    %278 = vmatpush1.msra.mxu0 %v148
    %279 = vmatprep.subr.mxu0 0.0
    %280 = vmatpush1.msra.mxu0 %v149
    %281 = vmatprep.subr.mxu0 0.0
    %282 = vmatpush1.msra.mxu0 %v150
    %283 = vmatprep.subr.mxu0 0.0
    %284 = vmatpush1.msra.mxu0 %v151
    %285 = vmatprep.subr.mxu0 0.0
    %286 = vmatpush1.msra.mxu0 %v152
    %287 = vmatprep.subr.mxu0 0.0
    %288 = vmatpush1.msra.mxu0 0.0
    %289 = vmatprep.subr.mxu0 0.0
    %290 = vmatpush1.msra.mxu0 0.0
    %291 = vmatprep.subr.mxu0 0.0
    %292 = vmatpush1.msra.mxu0 0.0
    %293 = vmatprep.subr.mxu0 0.0
    %294 = vmatpush1.msra.mxu0 0.0
    %295 = vmatprep.subr.mxu0 0.0
    %296 = vmatpush1.msra.mxu0 0.0
    %297 = vmatprep.subr.mxu0 0.0
    %298 = vmatpush1.msra.mxu0 0.0
    %299 = vmatprep.subr.mxu0 0.0
    %300 = vmatpush1.msra.mxu0 0.0
    %301 = vmatprep.subr.mxu0 0.0
    %302 = vmatpush1.msra.mxu0 0.0
    %303 = vmatprep.subr.mxu0 0.0
    %304 = vmatpush1.msra.mxu0 0.0
    %305 = vmatprep.subr.mxu0 0.0
    %306 = vmatpush1.msra.mxu0 0.0
    %307 = vmatprep.subr.mxu0 0.0
    %308 = vmatpush1.msra.mxu0 0.0
    %309 = vmatprep.subr.mxu0 0.0
    %310 = vmatpush1.msra.mxu0 0.0
    %311 = vmatprep.subr.mxu0 0.0
    %312 = vmatpush1.msra.mxu0 0.0
    %313 = vmatprep.subr.mxu0 0.0
    %314 = vmatpush1.msra.mxu0 0.0
    %315 = vmatprep.subr.mxu0 0.0
    %316 = vmatpush1.msra.mxu0 0.0
    %317 = vmatprep.subr.mxu0 0.0
    %318 = vmatpush1.msra.mxu0 0.0
    %319 = vmatprep.mubr.f32.mxu0 0.0
    %320 = vmatmul.mubr.f32.gmra.mrb[0].mxu0 %v170
    %v321 = vpop.f32.mrb[0].mxu0
    %v322 = vadd.f32 %v247, %v321
    %v323 = vpop.f32.mrb[0].mxu0
    %324 = vmatprep.mubr.f32.mxu0 0.0
    %325 = vmatmul.mubr.f32.gmra.mrb[0].mxu0 %v173
    %v326 = vpop.f32.mrb[0].mxu0
    %v327 = vadd.f32 %v252, %v326
    %v328 = vpop.f32.mrb[0].mxu0
    %329 = vdwg.mxu0
    %v330 = vmax.f32 %v322, 0.0
    %v331 = vmax.f32 %v327, 0.0
    %v332 = vld [vmem:[#allocation9] sm:$0xff]
    %v333 = vld [vmem:[#allocation9 + $0x8] sm:$0xff]
    %v334 = vld [vmem:[#allocation9 + $0x10] sm:$0xff]
    %v335 = vld [vmem:[#allocation9 + $0x18] sm:$0xff]
    %v336 = vld [vmem:[#allocation9 + $0x20] sm:$0xff]
    %v337 = vld [vmem:[#allocation9 + $0x28] sm:$0xff]
    %v338 = vld [vmem:[#allocation9 + $0x30] sm:$0xff]
    %v339 = vld [vmem:[#allocation9 + $0x38] sm:$0xff]
    %v340 = vld [vmem:[#allocation9 + $0x40] sm:$0xff]
    %v341 = vld [vmem:[#allocation9 + $0x48] sm:$0xff]
    %v342 = vld [vmem:[#allocation9 + $0x50] sm:$0xff]
    %v343 = vld [vmem:[#allocation9 + $0x58] sm:$0xff]
    %v344 = vld [vmem:[#allocation9 + $0x60] sm:$0xff]
    %v345 = vld [vmem:[#allocation9 + $0x68] sm:$0xff]
    %v346 = vld [vmem:[#allocation9 + $0x70] sm:$0xff]
    %v347 = vld [vmem:[#allocation9 + $0x78] sm:$0xff]
    %v348 = vld [vmem:[#allocation9 + $0x80] sm:$0xff]
    %v349 = vld [vmem:[#allocation9 + $0x88] sm:$0xff]
    %v350 = vld [vmem:[#allocation9 + $0x90] sm:$0xff]
    %v351 = vld [vmem:[#allocation9 + $0x98] sm:$0xff]
    %v352 = vld [vmem:[#allocation9 + $0xa0] sm:$0xff]
    %v353 = vld [vmem:[#allocation9 + $0xa8] sm:$0xff]
    %v354 = vld [vmem:[#allocation9 + $0xb0] sm:$0xff]
    %v355 = vld [vmem:[#allocation9 + $0xb8] sm:$0xff]
    %v356 = vld [vmem:[#allocation9 + $0xc0] sm:$0xff]
    %v357 = vld [vmem:[#allocation9 + $0xc8] sm:$0xff]
    %v358 = vld [vmem:[#allocation9 + $0xd0] sm:$0xff]
    %v359 = vld [vmem:[#allocation9 + $0xd8] sm:$0xff]
    %v360 = vld [vmem:[#allocation9 + $0xe0] sm:$0xff]
    %v361 = vld [vmem:[#allocation9 + $0xe8] sm:$0xff]
    %v362 = vld [vmem:[#allocation9 + $0xf0] sm:$0xff]
    %v363 = vld [vmem:[#allocation9 + $0xf8] sm:$0xff]
    %v364 = vld [vmem:[#allocation9 + $0x100] sm:$0xff]
    %v365 = vld [vmem:[#allocation9 + $0x108] sm:$0xff]
    %v366 = vld [vmem:[#allocation9 + $0x110] sm:$0xff]
    %v367 = vld [vmem:[#allocation9 + $0x118] sm:$0xff]
    %v368 = vld [vmem:[#allocation9 + $0x120] sm:$0xff]
    %v369 = vld [vmem:[#allocation9 + $0x128] sm:$0xff]
    %v370 = vld [vmem:[#allocation9 + $0x130] sm:$0xff]
    %v371 = vld [vmem:[#allocation9 + $0x138] sm:$0xff]
    %v372 = vld [vmem:[#allocation9 + $0x140] sm:$0xff]
    %v373 = vld [vmem:[#allocation9 + $0x148] sm:$0xff]
    %v374 = vld [vmem:[#allocation9 + $0x150] sm:$0xff]
    %v375 = vld [vmem:[#allocation9 + $0x158] sm:$0xff]
    %v376 = vld [vmem:[#allocation9 + $0x160] sm:$0xff]
    %v377 = vld [vmem:[#allocation9 + $0x168] sm:$0xff]
    %v378 = vld [vmem:[#allocation9 + $0x170] sm:$0xff]
    %v379 = vld [vmem:[#allocation9 + $0x178] sm:$0xff]
    %v380 = vld [vmem:[%s4] sm:$0x1]
    %381 = vst [vmem:[#allocation2 + $0x8] sm:$0xff] %v330
    %382 = vst [vmem:[#allocation2 + $0x18] sm:$0xff] %v331
    %v383 = vld [vmem:[#allocation2 + $0x6] sm:$0xff]
    %v384 = vld [vmem:[#allocation2 + $0x16] sm:$0xff]
    %385 = vst [vmem:[#allocation3] sm:$0xff] %v383
    %386 = vst [vmem:[#allocation3 + $0x18] sm:$0xff] %v384
    %v387 = vld [vmem:[#allocation2 + $0x7] sm:$0xff]
    %v388 = vld [vmem:[#allocation2 + $0x17] sm:$0xff]
    %389 = vst [vmem:[#allocation3 + $0x8] sm:$0xff] %v387
    %390 = vst [vmem:[#allocation3 + $0x20] sm:$0xff] %v388
    %v391 = vld [vmem:[#allocation2 + $0x8] sm:$0xff]
    %v392 = vld [vmem:[#allocation2 + $0x18] sm:$0xff]
    %393 = vst [vmem:[#allocation3 + $0x10] sm:$0xff] %v391
    %394 = vst [vmem:[#allocation3 + $0x28] sm:$0xff] %v392
    %v395 = vld [vmem:[#allocation3] sm:$0xff]
    %v396 = vld [vmem:[#allocation3 + $0x8] sm:$0xff]
    %v397 = vld [vmem:[#allocation3 + $0x10] sm:$0xff]
    %v398 = vld [vmem:[#allocation3 + $0x18] sm:$0xff]
    %v399 = vld [vmem:[#allocation3 + $0x20] sm:$0xff]
    %v400 = vld [vmem:[#allocation3 + $0x28] sm:$0xff]
    %v402 = vlaneseq
    %v403 = vshrl.u32 %v402, 7
    %v404 = vsub.s32 0, %v403
    %v405 = vrot.slane %v380, %v404
    %407 = vmatprep.subr.mxu0 0.0
    %408 = vmatpush1.msra.mxu0 %v332
    %409 = vmatprep.subr.mxu0 0.0
    %410 = vmatpush1.msra.mxu0 %v333
    %411 = vmatprep.subr.mxu0 0.0
    %412 = vmatpush1.msra.mxu0 %v334
    %413 = vmatprep.subr.mxu0 0.0
    %414 = vmatpush1.msra.mxu0 %v335
    %415 = vmatprep.subr.mxu0 0.0
    %416 = vmatpush1.msra.mxu0 %v336
    %417 = vmatprep.subr.mxu0 0.0
    %418 = vmatpush1.msra.mxu0 %v337
    %419 = vmatprep.subr.mxu0 0.0
    %420 = vmatpush1.msra.mxu0 %v338
    %421 = vmatprep.subr.mxu0 0.0
    %422 = vmatpush1.msra.mxu0 %v339
    %423 = vmatprep.subr.mxu0 0.0
    %424 = vmatpush1.msra.mxu0 %v340
    %425 = vmatprep.subr.mxu0 0.0
    %426 = vmatpush1.msra.mxu0 %v341
    %427 = vmatprep.subr.mxu0 0.0
    %428 = vmatpush1.msra.mxu0 %v342
    %429 = vmatprep.subr.mxu0 0.0
    %430 = vmatpush1.msra.mxu0 %v343
    %431 = vmatprep.subr.mxu0 0.0
    %432 = vmatpush1.msra.mxu0 %v344
    %433 = vmatprep.subr.mxu0 0.0
    %434 = vmatpush1.msra.mxu0 %v345
    %435 = vmatprep.subr.mxu0 0.0
    %436 = vmatpush1.msra.mxu0 %v346
    %437 = vmatprep.subr.mxu0 0.0
    %438 = vmatpush1.msra.mxu0 %v347
    %439 = vmatprep.subr.mxu0 0.0
    %440 = vmatpush1.msra.mxu0 %v348
    %441 = vmatprep.subr.mxu0 0.0
    %442 = vmatpush1.msra.mxu0 %v349
    %443 = vmatprep.subr.mxu0 0.0
    %444 = vmatpush1.msra.mxu0 %v350
    %445 = vmatprep.subr.mxu0 0.0
    %446 = vmatpush1.msra.mxu0 %v351
    %447 = vmatprep.subr.mxu0 0.0
    %448 = vmatpush1.msra.mxu0 %v352
    %449 = vmatprep.subr.mxu0 0.0
    %450 = vmatpush1.msra.mxu0 %v353
    %451 = vmatprep.subr.mxu0 0.0
    %452 = vmatpush1.msra.mxu0 %v354
    %453 = vmatprep.subr.mxu0 0.0
    %454 = vmatpush1.msra.mxu0 %v355
    %455 = vmatprep.subr.mxu0 0.0
    %456 = vmatpush1.msra.mxu0 %v356
    %457 = vmatprep.subr.mxu0 0.0
    %458 = vmatpush1.msra.mxu0 %v357
    %459 = vmatprep.subr.mxu0 0.0
    %460 = vmatpush1.msra.mxu0 %v358
    %461 = vmatprep.subr.mxu0 0.0
    %462 = vmatpush1.msra.mxu0 %v359
    %463 = vmatprep.subr.mxu0 0.0
    %464 = vmatpush1.msra.mxu0 %v360
    %465 = vmatprep.subr.mxu0 0.0
    %466 = vmatpush1.msra.mxu0 %v361
    %467 = vmatprep.subr.mxu0 0.0
    %468 = vmatpush1.msra.mxu0 %v362
    %469 = vmatprep.subr.mxu0 0.0
    %470 = vmatpush1.msra.mxu0 %v363
    %471 = vmatprep.mubr.f32.mxu0 %v396
    %472 = vmatmul.mubr.f32.gmra.mrb[0].mxu0 %v395
    %v473 = vpop.f32.mrb[0].mxu0
    %v474 = vadd.f32 %v405, %v473
    %v475 = vpop.f32.mrb[0].mxu0
    %476 = vmatprep.mubr.f32.mxu0 %v399
    %477 = vmatmul.mubr.f32.gmra.mrb[0].mxu0 %v398
    %v478 = vpop.f32.mrb[0].mxu0
    %v479 = vadd.f32 %v405, %v478
    %v480 = vpop.f32.mrb[0].mxu0
    %481 = vdwg.mxu0
    %482 = vmatprep.subr.mxu0 0.0
    %483 = vmatpush1.msra.mxu0 %v364
    %484 = vmatprep.subr.mxu0 0.0
    %485 = vmatpush1.msra.mxu0 %v365
    %486 = vmatprep.subr.mxu0 0.0
    %487 = vmatpush1.msra.mxu0 %v366
    %488 = vmatprep.subr.mxu0 0.0
    %489 = vmatpush1.msra.mxu0 %v367
    %490 = vmatprep.subr.mxu0 0.0
    %491 = vmatpush1.msra.mxu0 %v368
    %492 = vmatprep.subr.mxu0 0.0
    %493 = vmatpush1.msra.mxu0 %v369
    %494 = vmatprep.subr.mxu0 0.0
    %495 = vmatpush1.msra.mxu0 %v370
    %496 = vmatprep.subr.mxu0 0.0
    %497 = vmatpush1.msra.mxu0 %v371
    %498 = vmatprep.subr.mxu0 0.0
    %499 = vmatpush1.msra.mxu0 %v372
    %500 = vmatprep.subr.mxu0 0.0
    %501 = vmatpush1.msra.mxu0 %v373
    %502 = vmatprep.subr.mxu0 0.0
    %503 = vmatpush1.msra.mxu0 %v374
    %504 = vmatprep.subr.mxu0 0.0
    %505 = vmatpush1.msra.mxu0 %v375
    %506 = vmatprep.subr.mxu0 0.0
    %507 = vmatpush1.msra.mxu0 %v376
    %508 = vmatprep.subr.mxu0 0.0
    %509 = vmatpush1.msra.mxu0 %v377
    %510 = vmatprep.subr.mxu0 0.0
    %511 = vmatpush1.msra.mxu0 %v378
    %512 = vmatprep.subr.mxu0 0.0
    %513 = vmatpush1.msra.mxu0 %v379
    %514 = vmatprep.subr.mxu0 0.0
    %515 = vmatpush1.msra.mxu0 0.0
    %516 = vmatprep.subr.mxu0 0.0
    %517 = vmatpush1.msra.mxu0 0.0
    %518 = vmatprep.subr.mxu0 0.0
    %519 = vmatpush1.msra.mxu0 0.0
    %520 = vmatprep.subr.mxu0 0.0
    %521 = vmatpush1.msra.mxu0 0.0
    %522 = vmatprep.subr.mxu0 0.0
    %523 = vmatpush1.msra.mxu0 0.0
    %524 = vmatprep.subr.mxu0 0.0
    %525 = vmatpush1.msra.mxu0 0.0
    %526 = vmatprep.subr.mxu0 0.0
    %527 = vmatpush1.msra.mxu0 0.0
    %528 = vmatprep.subr.mxu0 0.0
    %529 = vmatpush1.msra.mxu0 0.0
    %530 = vmatprep.subr.mxu0 0.0
    %531 = vmatpush1.msra.mxu0 0.0
    %532 = vmatprep.subr.mxu0 0.0
    %533 = vmatpush1.msra.mxu0 0.0
    %534 = vmatprep.subr.mxu0 0.0
    %535 = vmatpush1.msra.mxu0 0.0
    %536 = vmatprep.subr.mxu0 0.0
    %537 = vmatpush1.msra.mxu0 0.0
    %538 = vmatprep.subr.mxu0 0.0
    %539 = vmatpush1.msra.mxu0 0.0
    %540 = vmatprep.subr.mxu0 0.0
    %541 = vmatpush1.msra.mxu0 0.0
    %542 = vmatprep.subr.mxu0 0.0
    %543 = vmatpush1.msra.mxu0 0.0
    %544 = vmatprep.subr.mxu0 0.0
    %545 = vmatpush1.msra.mxu0 0.0
    %546 = vmatprep.mubr.f32.mxu0 0.0
    %547 = vmatmul.mubr.f32.gmra.mrb[0].mxu0 %v397
    %v548 = vpop.f32.mrb[0].mxu0
    %v549 = vadd.f32 %v474, %v548
    %v550 = vpop.f32.mrb[0].mxu0
    %551 = vmatprep.mubr.f32.mxu0 0.0
    %552 = vmatmul.mubr.f32.gmra.mrb[0].mxu0 %v400
    %v553 = vpop.f32.mrb[0].mxu0
    %v554 = vadd.f32 %v479, %v553
    %v555 = vpop.f32.mrb[0].mxu0
    %556 = vdwg.mxu0
    %v557 = vmax.f32 %v549, 0.0
    %v558 = vmax.f32 %v554, 0.0
    %v559 = vld [vmem:[#allocation10] sm:$0xff]
    %v560 = vld [vmem:[#allocation10 + $0x8] sm:$0xff]
    %v561 = vld [vmem:[#allocation10 + $0x10] sm:$0xff]
    %v562 = vld [vmem:[#allocation10 + $0x18] sm:$0xff]
    %v563 = vld [vmem:[#allocation10 + $0x20] sm:$0xff]
    %v564 = vld [vmem:[#allocation10 + $0x28] sm:$0xff]
    %v565 = vld [vmem:[#allocation10 + $0x30] sm:$0xff]
    %v566 = vld [vmem:[#allocation10 + $0x38] sm:$0xff]
    %v567 = vld [vmem:[#allocation10 + $0x40] sm:$0xff]
    %v568 = vld [vmem:[#allocation10 + $0x48] sm:$0xff]
    %v569 = vld [vmem:[#allocation10 + $0x50] sm:$0xff]
    %v570 = vld [vmem:[#allocation10 + $0x58] sm:$0xff]
    %v571 = vld [vmem:[#allocation10 + $0x60] sm:$0xff]
    %v572 = vld [vmem:[#allocation10 + $0x68] sm:$0xff]
    %v573 = vld [vmem:[#allocation10 + $0x70] sm:$0xff]
    %v574 = vld [vmem:[#allocation10 + $0x78] sm:$0xff]
    %v575 = vld [vmem:[%s6] sm:$0x1]
    %v577 = vlaneseq
    %v578 = vshrl.u32 %v577, 7
    %v579 = vsub.s32 0, %v578
    %v580 = vrot.slane %v575, %v579
    %582 = vmatprep.subr.mxu0 0.0
    %583 = vmatpush1.msra.mxu0 %v559
    %584 = vmatprep.subr.mxu0 0.0
    %585 = vmatpush1.msra.mxu0 %v560
    %586 = vmatprep.subr.mxu0 0.0
    %587 = vmatpush1.msra.mxu0 %v561
    %588 = vmatprep.subr.mxu0 0.0
    %589 = vmatpush1.msra.mxu0 %v562
    %590 = vmatprep.subr.mxu0 0.0
    %591 = vmatpush1.msra.mxu0 %v563
    %592 = vmatprep.subr.mxu0 0.0
    %593 = vmatpush1.msra.mxu0 %v564
    %594 = vmatprep.subr.mxu0 0.0
    %595 = vmatpush1.msra.mxu0 %v565
    %596 = vmatprep.subr.mxu0 0.0
    %597 = vmatpush1.msra.mxu0 %v566
    %598 = vmatprep.subr.mxu0 0.0
    %599 = vmatpush1.msra.mxu0 %v567
    %600 = vmatprep.subr.mxu0 0.0
    %601 = vmatpush1.msra.mxu0 %v568
    %602 = vmatprep.subr.mxu0 0.0
    %603 = vmatpush1.msra.mxu0 %v569
    %604 = vmatprep.subr.mxu0 0.0
    %605 = vmatpush1.msra.mxu0 %v570
    %606 = vmatprep.subr.mxu0 0.0
    %607 = vmatpush1.msra.mxu0 %v571
    %608 = vmatprep.subr.mxu0 0.0
    %609 = vmatpush1.msra.mxu0 %v572
    %610 = vmatprep.subr.mxu0 0.0
    %611 = vmatpush1.msra.mxu0 %v573
    %612 = vmatprep.subr.mxu0 0.0
    %613 = vmatpush1.msra.mxu0 %v574
    %614 = vmatprep.subr.mxu0 0.0
    %615 = vmatpush1.msra.mxu0 0.0
    %616 = vmatprep.subr.mxu0 0.0
    %617 = vmatpush1.msra.mxu0 0.0
    %618 = vmatprep.subr.mxu0 0.0
    %619 = vmatpush1.msra.mxu0 0.0
    %620 = vmatprep.subr.mxu0 0.0
    %621 = vmatpush1.msra.mxu0 0.0
    %622 = vmatprep.subr.mxu0 0.0
    %623 = vmatpush1.msra.mxu0 0.0
    %624 = vmatprep.subr.mxu0 0.0
    %625 = vmatpush1.msra.mxu0 0.0
    %626 = vmatprep.subr.mxu0 0.0
    %627 = vmatpush1.msra.mxu0 0.0
    %628 = vmatprep.subr.mxu0 0.0
    %629 = vmatpush1.msra.mxu0 0.0
    %630 = vmatprep.subr.mxu0 0.0
    %631 = vmatpush1.msra.mxu0 0.0
    %632 = vmatprep.subr.mxu0 0.0
    %633 = vmatpush1.msra.mxu0 0.0
    %634 = vmatprep.subr.mxu0 0.0
    %635 = vmatpush1.msra.mxu0 0.0
    %636 = vmatprep.subr.mxu0 0.0
    %637 = vmatpush1.msra.mxu0 0.0
    %638 = vmatprep.subr.mxu0 0.0
    %639 = vmatpush1.msra.mxu0 0.0
    %640 = vmatprep.subr.mxu0 0.0
    %641 = vmatpush1.msra.mxu0 0.0
    %642 = vmatprep.subr.mxu0 0.0
    %643 = vmatpush1.msra.mxu0 0.0
    %644 = vmatprep.subr.mxu0 0.0
    %645 = vmatpush1.msra.mxu0 0.0
    %646 = vmatprep.mubr.f32.mxu0 0.0
    %647 = vmatmul.mubr.f32.gmra.mrb[0].mxu0 %v103
    %v648 = vpop.f32.mrb[0].mxu0
    %v649 = vadd.f32 %v580, %v648
    %v650 = vpop.f32.mrb[0].mxu0
    %651 = vmatprep.mubr.f32.mxu0 0.0
    %652 = vmatmul.mubr.f32.gmra.mrb[0].mxu0 %v104
    %v653 = vpop.f32.mrb[0].mxu0
    %v654 = vadd.f32 %v580, %v653
    %v655 = vpop.f32.mrb[0].mxu0
    %656 = vdwg.mxu0
    %v657 = vadd.f32 %v557, %v649
    %v658 = vadd.f32 %v558, %v654
    %v659 = vmax.f32 %v657, 0.0
    %v660 = vmax.f32 %v658, 0.0
    %s661 = scalar_lea.vmem [#allocation7], 384
    %v662 = vld [vmem:[%s661] sm:$0xff]
    %v663 = vld [vmem:[%s661 + $0x8] sm:$0xff]
    %v664 = vld [vmem:[%s661 + $0x10] sm:$0xff]
    %v665 = vld [vmem:[%s661 + $0x18] sm:$0xff]
    %v666 = vld [vmem:[%s661 + $0x20] sm:$0xff]
    %v667 = vld [vmem:[%s661 + $0x28] sm:$0xff]
    %v668 = vld [vmem:[%s661 + $0x30] sm:$0xff]
    %v669 = vld [vmem:[%s661 + $0x38] sm:$0xff]
    %v670 = vld [vmem:[%s661 + $0x40] sm:$0xff]
    %v671 = vld [vmem:[%s661 + $0x48] sm:$0xff]
    %v672 = vld [vmem:[%s661 + $0x50] sm:$0xff]
    %v673 = vld [vmem:[%s661 + $0x58] sm:$0xff]
    %v674 = vld [vmem:[%s661 + $0x60] sm:$0xff]
    %v675 = vld [vmem:[%s661 + $0x68] sm:$0xff]
    %v676 = vld [vmem:[%s661 + $0x70] sm:$0xff]
    %v677 = vld [vmem:[%s661 + $0x78] sm:$0xff]
    %v678 = vld [vmem:[%s661 + $0x80] sm:$0xff]
    %v679 = vld [vmem:[%s661 + $0x88] sm:$0xff]
    %v680 = vld [vmem:[%s661 + $0x90] sm:$0xff]
    %v681 = vld [vmem:[%s661 + $0x98] sm:$0xff]
    %v682 = vld [vmem:[%s661 + $0xa0] sm:$0xff]
    %v683 = vld [vmem:[%s661 + $0xa8] sm:$0xff]
    %v684 = vld [vmem:[%s661 + $0xb0] sm:$0xff]
    %v685 = vld [vmem:[%s661 + $0xb8] sm:$0xff]
    %v686 = vld [vmem:[%s661 + $0xc0] sm:$0xff]
    %v687 = vld [vmem:[%s661 + $0xc8] sm:$0xff]
    %v688 = vld [vmem:[%s661 + $0xd0] sm:$0xff]
    %v689 = vld [vmem:[%s661 + $0xd8] sm:$0xff]
    %v690 = vld [vmem:[%s661 + $0xe0] sm:$0xff]
    %v691 = vld [vmem:[%s661 + $0xe8] sm:$0xff]
    %v692 = vld [vmem:[%s661 + $0xf0] sm:$0xff]
    %v693 = vld [vmem:[%s661 + $0xf8] sm:$0xff]
    %v694 = vld [vmem:[%s661 + $0x100] sm:$0xff]
    %v695 = vld [vmem:[%s661 + $0x108] sm:$0xff]
    %v696 = vld [vmem:[%s661 + $0x110] sm:$0xff]
    %v697 = vld [vmem:[%s661 + $0x118] sm:$0xff]
    %v698 = vld [vmem:[%s661 + $0x120] sm:$0xff]
    %v699 = vld [vmem:[%s661 + $0x128] sm:$0xff]
    %v700 = vld [vmem:[%s661 + $0x130] sm:$0xff]
    %v701 = vld [vmem:[%s661 + $0x138] sm:$0xff]
    %v702 = vld [vmem:[%s661 + $0x140] sm:$0xff]
    %v703 = vld [vmem:[%s661 + $0x148] sm:$0xff]
    %v704 = vld [vmem:[%s661 + $0x150] sm:$0xff]
    %v705 = vld [vmem:[%s661 + $0x158] sm:$0xff]
    %v706 = vld [vmem:[%s661 + $0x160] sm:$0xff]
    %v707 = vld [vmem:[%s661 + $0x168] sm:$0xff]
    %v708 = vld [vmem:[%s661 + $0x170] sm:$0xff]
    %v709 = vld [vmem:[%s661 + $0x178] sm:$0xff]
    %s710 = scalar_lea.vmem %s2, 1
    %v711 = vld [vmem:[%s710] sm:$0x1]
    %712 = vst [vmem:[#allocation2 + $0x8] sm:$0xff] %v659
    %713 = vst [vmem:[#allocation2 + $0x18] sm:$0xff] %v660
    %v714 = vld [vmem:[#allocation2 + $0x4] sm:$0xff]
    %v715 = vld [vmem:[#allocation2 + $0x14] sm:$0xff]
    %716 = vst [vmem:[#allocation3] sm:$0xff] %v714
    %717 = vst [vmem:[#allocation3 + $0x18] sm:$0xff] %v715
    %v718 = vld [vmem:[#allocation2 + $0x6] sm:$0xff]
    %v719 = vld [vmem:[#allocation2 + $0x16] sm:$0xff]
    %720 = vst [vmem:[#allocation3 + $0x8] sm:$0xff] %v718
    %721 = vst [vmem:[#allocation3 + $0x20] sm:$0xff] %v719
    %v722 = vld [vmem:[#allocation2 + $0x8] sm:$0xff]
    %v723 = vld [vmem:[#allocation2 + $0x18] sm:$0xff]
    %724 = vst [vmem:[#allocation3 + $0x10] sm:$0xff] %v722
    %725 = vst [vmem:[#allocation3 + $0x28] sm:$0xff] %v723
    %v726 = vld [vmem:[#allocation3] sm:$0xff]
    %v727 = vld [vmem:[#allocation3 + $0x8] sm:$0xff]
    %v728 = vld [vmem:[#allocation3 + $0x10] sm:$0xff]
    %v729 = vld [vmem:[#allocation3 + $0x18] sm:$0xff]
    %v730 = vld [vmem:[#allocation3 + $0x20] sm:$0xff]
    %v731 = vld [vmem:[#allocation3 + $0x28] sm:$0xff]
    %v733 = vlaneseq
    %v734 = vshrl.u32 %v733, 7
    %v735 = vsub.s32 0, %v734
    %v736 = vrot.slane %v711, %v735
    %738 = vmatprep.subr.mxu0 0.0
    %739 = vmatpush1.msra.mxu0 %v662
    %740 = vmatprep.subr.mxu0 0.0
    %741 = vmatpush1.msra.mxu0 %v663
    %742 = vmatprep.subr.mxu0 0.0
    %743 = vmatpush1.msra.mxu0 %v664
    %744 = vmatprep.subr.mxu0 0.0
    %745 = vmatpush1.msra.mxu0 %v665
    %746 = vmatprep.subr.mxu0 0.0
    %747 = vmatpush1.msra.mxu0 %v666
    %748 = vmatprep.subr.mxu0 0.0
    %749 = vmatpush1.msra.mxu0 %v667
    %750 = vmatprep.subr.mxu0 0.0
    %751 = vmatpush1.msra.mxu0 %v668
    %752 = vmatprep.subr.mxu0 0.0
    %753 = vmatpush1.msra.mxu0 %v669
    %754 = vmatprep.subr.mxu0 0.0
    %755 = vmatpush1.msra.mxu0 %v670
    %756 = vmatprep.subr.mxu0 0.0
    %757 = vmatpush1.msra.mxu0 %v671
    %758 = vmatprep.subr.mxu0 0.0
    %759 = vmatpush1.msra.mxu0 %v672
    %760 = vmatprep.subr.mxu0 0.0
    %761 = vmatpush1.msra.mxu0 %v673
    %762 = vmatprep.subr.mxu0 0.0
    %763 = vmatpush1.msra.mxu0 %v674
    %764 = vmatprep.subr.mxu0 0.0
    %765 = vmatpush1.msra.mxu0 %v675
    %766 = vmatprep.subr.mxu0 0.0
    %767 = vmatpush1.msra.mxu0 %v676
    %768 = vmatprep.subr.mxu0 0.0
    %769 = vmatpush1.msra.mxu0 %v677
    %770 = vmatprep.subr.mxu0 0.0
    %771 = vmatpush1.msra.mxu0 %v678
    %772 = vmatprep.subr.mxu0 0.0
    %773 = vmatpush1.msra.mxu0 %v679
    %774 = vmatprep.subr.mxu0 0.0
    %775 = vmatpush1.msra.mxu0 %v680
    %776 = vmatprep.subr.mxu0 0.0
    %777 = vmatpush1.msra.mxu0 %v681
    %778 = vmatprep.subr.mxu0 0.0
    %779 = vmatpush1.msra.mxu0 %v682
    %780 = vmatprep.subr.mxu0 0.0
    %781 = vmatpush1.msra.mxu0 %v683
    %782 = vmatprep.subr.mxu0 0.0
    %783 = vmatpush1.msra.mxu0 %v684
    %784 = vmatprep.subr.mxu0 0.0
    %785 = vmatpush1.msra.mxu0 %v685
    %786 = vmatprep.subr.mxu0 0.0
    %787 = vmatpush1.msra.mxu0 %v686
    %788 = vmatprep.subr.mxu0 0.0
    %789 = vmatpush1.msra.mxu0 %v687
    %790 = vmatprep.subr.mxu0 0.0
    %791 = vmatpush1.msra.mxu0 %v688
    %792 = vmatprep.subr.mxu0 0.0
    %793 = vmatpush1.msra.mxu0 %v689
    %794 = vmatprep.subr.mxu0 0.0
    %795 = vmatpush1.msra.mxu0 %v690
    %796 = vmatprep.subr.mxu0 0.0
    %797 = vmatpush1.msra.mxu0 %v691
    %798 = vmatprep.subr.mxu0 0.0
    %799 = vmatpush1.msra.mxu0 %v692
    %800 = vmatprep.subr.mxu0 0.0
    %801 = vmatpush1.msra.mxu0 %v693
    %802 = vmatprep.mubr.f32.mxu0 %v727
    %803 = vmatmul.mubr.f32.gmra.mrb[0].mxu0 %v726
    %v804 = vpop.f32.mrb[0].mxu0
    %v805 = vadd.f32 %v736, %v804
    %v806 = vpop.f32.mrb[0].mxu0
    %807 = vmatprep.mubr.f32.mxu0 %v730
    %808 = vmatmul.mubr.f32.gmra.mrb[0].mxu0 %v729
    %v809 = vpop.f32.mrb[0].mxu0
    %v810 = vadd.f32 %v736, %v809
    %v811 = vpop.f32.mrb[0].mxu0
    %812 = vdwg.mxu0
    %813 = vmatprep.subr.mxu0 0.0
    %814 = vmatpush1.msra.mxu0 %v694
    %815 = vmatprep.subr.mxu0 0.0
    %816 = vmatpush1.msra.mxu0 %v695
    %817 = vmatprep.subr.mxu0 0.0
    %818 = vmatpush1.msra.mxu0 %v696
    %819 = vmatprep.subr.mxu0 0.0
    %820 = vmatpush1.msra.mxu0 %v697
    %821 = vmatprep.subr.mxu0 0.0
    %822 = vmatpush1.msra.mxu0 %v698
    %823 = vmatprep.subr.mxu0 0.0
    %824 = vmatpush1.msra.mxu0 %v699
    %825 = vmatprep.subr.mxu0 0.0
    %826 = vmatpush1.msra.mxu0 %v700
    %827 = vmatprep.subr.mxu0 0.0
    %828 = vmatpush1.msra.mxu0 %v701
    %829 = vmatprep.subr.mxu0 0.0
    %830 = vmatpush1.msra.mxu0 %v702
    %831 = vmatprep.subr.mxu0 0.0
    %832 = vmatpush1.msra.mxu0 %v703
    %833 = vmatprep.subr.mxu0 0.0
    %834 = vmatpush1.msra.mxu0 %v704
    %835 = vmatprep.subr.mxu0 0.0
    %836 = vmatpush1.msra.mxu0 %v705
    %837 = vmatprep.subr.mxu0 0.0
    %838 = vmatpush1.msra.mxu0 %v706
    %839 = vmatprep.subr.mxu0 0.0
    %840 = vmatpush1.msra.mxu0 %v707
    %841 = vmatprep.subr.mxu0 0.0
    %842 = vmatpush1.msra.mxu0 %v708
    %843 = vmatprep.subr.mxu0 0.0
    %844 = vmatpush1.msra.mxu0 %v709
    %845 = vmatprep.subr.mxu0 0.0
    %846 = vmatpush1.msra.mxu0 0.0
    %847 = vmatprep.subr.mxu0 0.0
    %848 = vmatpush1.msra.mxu0 0.0
    %849 = vmatprep.subr.mxu0 0.0
    %850 = vmatpush1.msra.mxu0 0.0
    %851 = vmatprep.subr.mxu0 0.0
    %852 = vmatpush1.msra.mxu0 0.0
    %853 = vmatprep.subr.mxu0 0.0
    %854 = vmatpush1.msra.mxu0 0.0
    %855 = vmatprep.subr.mxu0 0.0
    %856 = vmatpush1.msra.mxu0 0.0
    %857 = vmatprep.subr.mxu0 0.0
    %858 = vmatpush1.msra.mxu0 0.0
    %859 = vmatprep.subr.mxu0 0.0
    %860 = vmatpush1.msra.mxu0 0.0
    %861 = vmatprep.subr.mxu0 0.0
    %862 = vmatpush1.msra.mxu0 0.0
    %863 = vmatprep.subr.mxu0 0.0
    %864 = vmatpush1.msra.mxu0 0.0
    %865 = vmatprep.subr.mxu0 0.0
    %866 = vmatpush1.msra.mxu0 0.0
    %867 = vmatprep.subr.mxu0 0.0
    %868 = vmatpush1.msra.mxu0 0.0
    %869 = vmatprep.subr.mxu0 0.0
    %870 = vmatpush1.msra.mxu0 0.0
    %871 = vmatprep.subr.mxu0 0.0
    %872 = vmatpush1.msra.mxu0 0.0
    %873 = vmatprep.subr.mxu0 0.0
    %874 = vmatpush1.msra.mxu0 0.0
    %875 = vmatprep.subr.mxu0 0.0
    %876 = vmatpush1.msra.mxu0 0.0
    %877 = vmatprep.mubr.f32.mxu0 0.0
    %878 = vmatmul.mubr.f32.gmra.mrb[0].mxu0 %v728
    %v879 = vpop.f32.mrb[0].mxu0
    %v880 = vadd.f32 %v805, %v879
    %v881 = vpop.f32.mrb[0].mxu0
    %882 = vmatprep.mubr.f32.mxu0 0.0
    %883 = vmatmul.mubr.f32.gmra.mrb[0].mxu0 %v731
    %v884 = vpop.f32.mrb[0].mxu0
    %v885 = vadd.f32 %v810, %v884
    %v886 = vpop.f32.mrb[0].mxu0
    %887 = vdwg.mxu0
    %v888 = vmax.f32 %v880, 0.0
    %v889 = vmax.f32 %v885, 0.0
    %s890 = scalar_lea.vmem [#allocation9], 384
    %v891 = vld [vmem:[%s890] sm:$0xff]
    %v892 = vld [vmem:[%s890 + $0x8] sm:$0xff]
    %v893 = vld [vmem:[%s890 + $0x10] sm:$0xff]
    %v894 = vld [vmem:[%s890 + $0x18] sm:$0xff]
    %v895 = vld [vmem:[%s890 + $0x20] sm:$0xff]
    %v896 = vld [vmem:[%s890 + $0x28] sm:$0xff]
    %v897 = vld [vmem:[%s890 + $0x30] sm:$0xff]
    %v898 = vld [vmem:[%s890 + $0x38] sm:$0xff]
    %v899 = vld [vmem:[%s890 + $0x40] sm:$0xff]
    %v900 = vld [vmem:[%s890 + $0x48] sm:$0xff]
    %v901 = vld [vmem:[%s890 + $0x50] sm:$0xff]
    %v902 = vld [vmem:[%s890 + $0x58] sm:$0xff]
    %v903 = vld [vmem:[%s890 + $0x60] sm:$0xff]
    %v904 = vld [vmem:[%s890 + $0x68] sm:$0xff]
    %v905 = vld [vmem:[%s890 + $0x70] sm:$0xff]
    %v906 = vld [vmem:[%s890 + $0x78] sm:$0xff]
    %v907 = vld [vmem:[%s890 + $0x80] sm:$0xff]
    %v908 = vld [vmem:[%s890 + $0x88] sm:$0xff]
    %v909 = vld [vmem:[%s890 + $0x90] sm:$0xff]
    %v910 = vld [vmem:[%s890 + $0x98] sm:$0xff]
    %v911 = vld [vmem:[%s890 + $0xa0] sm:$0xff]
    %v912 = vld [vmem:[%s890 + $0xa8] sm:$0xff]
    %v913 = vld [vmem:[%s890 + $0xb0] sm:$0xff]
    %v914 = vld [vmem:[%s890 + $0xb8] sm:$0xff]
    %v915 = vld [vmem:[%s890 + $0xc0] sm:$0xff]
    %v916 = vld [vmem:[%s890 + $0xc8] sm:$0xff]
    %v917 = vld [vmem:[%s890 + $0xd0] sm:$0xff]
    %v918 = vld [vmem:[%s890 + $0xd8] sm:$0xff]
    %v919 = vld [vmem:[%s890 + $0xe0] sm:$0xff]
    %v920 = vld [vmem:[%s890 + $0xe8] sm:$0xff]
    %v921 = vld [vmem:[%s890 + $0xf0] sm:$0xff]
    %v922 = vld [vmem:[%s890 + $0xf8] sm:$0xff]
    %v923 = vld [vmem:[%s890 + $0x100] sm:$0xff]
    %v924 = vld [vmem:[%s890 + $0x108] sm:$0xff]
    %v925 = vld [vmem:[%s890 + $0x110] sm:$0xff]
    %v926 = vld [vmem:[%s890 + $0x118] sm:$0xff]
    %v927 = vld [vmem:[%s890 + $0x120] sm:$0xff]
    %v928 = vld [vmem:[%s890 + $0x128] sm:$0xff]
    %v929 = vld [vmem:[%s890 + $0x130] sm:$0xff]
    %v930 = vld [vmem:[%s890 + $0x138] sm:$0xff]
    %v931 = vld [vmem:[%s890 + $0x140] sm:$0xff]
    %v932 = vld [vmem:[%s890 + $0x148] sm:$0xff]
    %v933 = vld [vmem:[%s890 + $0x150] sm:$0xff]
    %v934 = vld [vmem:[%s890 + $0x158] sm:$0xff]
    %v935 = vld [vmem:[%s890 + $0x160] sm:$0xff]
    %v936 = vld [vmem:[%s890 + $0x168] sm:$0xff]
    %v937 = vld [vmem:[%s890 + $0x170] sm:$0xff]
    %v938 = vld [vmem:[%s890 + $0x178] sm:$0xff]
    %s939 = scalar_lea.vmem %s4, 1
    %v940 = vld [vmem:[%s939] sm:$0x1]
    %941 = vst [vmem:[#allocation2 + $0x8] sm:$0xff] %v888
    %942 = vst [vmem:[#allocation2 + $0x18] sm:$0xff] %v889
    %v943 = vld [vmem:[#allocation2 + $0x4] sm:$0xff]
    %v944 = vld [vmem:[#allocation2 + $0x14] sm:$0xff]
    %945 = vst [vmem:[#allocation3] sm:$0xff] %v943
    %946 = vst [vmem:[#allocation3 + $0x18] sm:$0xff] %v944
    %v947 = vld [vmem:[#allocation2 + $0x6] sm:$0xff]
    %v948 = vld [vmem:[#allocation2 + $0x16] sm:$0xff]
    %949 = vst [vmem:[#allocation3 + $0x8] sm:$0xff] %v947
    %950 = vst [vmem:[#allocation3 + $0x20] sm:$0xff] %v948
    %v951 = vld [vmem:[#allocation2 + $0x8] sm:$0xff]
    %v952 = vld [vmem:[#allocation2 + $0x18] sm:$0xff]
    %953 = vst [vmem:[#allocation3 + $0x10] sm:$0xff] %v951
    %954 = vst [vmem:[#allocation3 + $0x28] sm:$0xff] %v952
    %v955 = vld [vmem:[#allocation3] sm:$0xff]
    %v956 = vld [vmem:[#allocation3 + $0x8] sm:$0xff]
    %v957 = vld [vmem:[#allocation3 + $0x10] sm:$0xff]
    %v958 = vld [vmem:[#allocation3 + $0x18] sm:$0xff]
    %v959 = vld [vmem:[#allocation3 + $0x20] sm:$0xff]
    %v960 = vld [vmem:[#allocation3 + $0x28] sm:$0xff]
    %v962 = vlaneseq
    %v963 = vshrl.u32 %v962, 7
    %v964 = vsub.s32 0, %v963
    %v965 = vrot.slane %v940, %v964
    %967 = vmatprep.subr.mxu0 0.0
    %968 = vmatpush1.msra.mxu0 %v891
    %969 = vmatprep.subr.mxu0 0.0
    %970 = vmatpush1.msra.mxu0 %v892
    %971 = vmatprep.subr.mxu0 0.0
    %972 = vmatpush1.msra.mxu0 %v893
    %973 = vmatprep.subr.mxu0 0.0
    %974 = vmatpush1.msra.mxu0 %v894
    %975 = vmatprep.subr.mxu0 0.0
    %976 = vmatpush1.msra.mxu0 %v895
    %977 = vmatprep.subr.mxu0 0.0
    %978 = vmatpush1.msra.mxu0 %v896
    %979 = vmatprep.subr.mxu0 0.0
    %980 = vmatpush1.msra.mxu0 %v897
    %981 = vmatprep.subr.mxu0 0.0
    %982 = vmatpush1.msra.mxu0 %v898
    %983 = vmatprep.subr.mxu0 0.0
    %984 = vmatpush1.msra.mxu0 %v899
    %985 = vmatprep.subr.mxu0 0.0
    %986 = vmatpush1.msra.mxu0 %v900
    %987 = vmatprep.subr.mxu0 0.0
    %988 = vmatpush1.msra.mxu0 %v901
    %989 = vmatprep.subr.mxu0 0.0
    %990 = vmatpush1.msra.mxu0 %v902
    %991 = vmatprep.subr.mxu0 0.0
    %992 = vmatpush1.msra.mxu0 %v903
    %993 = vmatprep.subr.mxu0 0.0
    %994 = vmatpush1.msra.mxu0 %v904
    %995 = vmatprep.subr.mxu0 0.0
    %996 = vmatpush1.msra.mxu0 %v905
    %997 = vmatprep.subr.mxu0 0.0
    %998 = vmatpush1.msra.mxu0 %v906
    %999 = vmatprep.subr.mxu0 0.0
    %1000 = vmatpush1.msra.mxu0 %v907
    %1001 = vmatprep.subr.mxu0 0.0
    %1002 = vmatpush1.msra.mxu0 %v908
    %1003 = vmatprep.subr.mxu0 0.0
    %1004 = vmatpush1.msra.mxu0 %v909
    %1005 = vmatprep.subr.mxu0 0.0
    %1006 = vmatpush1.msra.mxu0 %v910
    %1007 = vmatprep.subr.mxu0 0.0
    %1008 = vmatpush1.msra.mxu0 %v911
    %1009 = vmatprep.subr.mxu0 0.0
    %1010 = vmatpush1.msra.mxu0 %v912
    %1011 = vmatprep.subr.mxu0 0.0
    %1012 = vmatpush1.msra.mxu0 %v913
    %1013 = vmatprep.subr.mxu0 0.0
    %1014 = vmatpush1.msra.mxu0 %v914
    %1015 = vmatprep.subr.mxu0 0.0
    %1016 = vmatpush1.msra.mxu0 %v915
    %1017 = vmatprep.subr.mxu0 0.0
    %1018 = vmatpush1.msra.mxu0 %v916
    %1019 = vmatprep.subr.mxu0 0.0
    %1020 = vmatpush1.msra.mxu0 %v917
    %1021 = vmatprep.subr.mxu0 0.0
    %1022 = vmatpush1.msra.mxu0 %v918
    %1023 = vmatprep.subr.mxu0 0.0
    %1024 = vmatpush1.msra.mxu0 %v919
    %1025 = vmatprep.subr.mxu0 0.0
    %1026 = vmatpush1.msra.mxu0 %v920
    %1027 = vmatprep.subr.mxu0 0.0
    %1028 = vmatpush1.msra.mxu0 %v921
    %1029 = vmatprep.subr.mxu0 0.0
    %1030 = vmatpush1.msra.mxu0 %v922
    %1031 = vmatprep.mubr.f32.mxu0 %v956
    %1032 = vmatmul.mubr.f32.gmra.mrb[0].mxu0 %v955
    %v1033 = vpop.f32.mrb[0].mxu0
    %v1034 = vadd.f32 %v965, %v1033
    %v1035 = vpop.f32.mrb[0].mxu0
    %1036 = vmatprep.mubr.f32.mxu0 %v959
    %1037 = vmatmul.mubr.f32.gmra.mrb[0].mxu0 %v958
    %v1038 = vpop.f32.mrb[0].mxu0
    %v1039 = vadd.f32 %v965, %v1038
    %v1040 = vpop.f32.mrb[0].mxu0
    %1041 = vdwg.mxu0
    %1042 = vmatprep.subr.mxu0 0.0
    %1043 = vmatpush1.msra.mxu0 %v923
    %1044 = vmatprep.subr.mxu0 0.0
    %1045 = vmatpush1.msra.mxu0 %v924
    %1046 = vmatprep.subr.mxu0 0.0
    %1047 = vmatpush1.msra.mxu0 %v925
    %1048 = vmatprep.subr.mxu0 0.0
    %1049 = vmatpush1.msra.mxu0 %v926
    %1050 = vmatprep.subr.mxu0 0.0
    %1051 = vmatpush1.msra.mxu0 %v927
    %1052 = vmatprep.subr.mxu0 0.0
    %1053 = vmatpush1.msra.mxu0 %v928
    %1054 = vmatprep.subr.mxu0 0.0
    %1055 = vmatpush1.msra.mxu0 %v929
    %1056 = vmatprep.subr.mxu0 0.0
    %1057 = vmatpush1.msra.mxu0 %v930
    %1058 = vmatprep.subr.mxu0 0.0
    %1059 = vmatpush1.msra.mxu0 %v931
    %1060 = vmatprep.subr.mxu0 0.0
    %1061 = vmatpush1.msra.mxu0 %v932
    %1062 = vmatprep.subr.mxu0 0.0
    %1063 = vmatpush1.msra.mxu0 %v933
    %1064 = vmatprep.subr.mxu0 0.0
    %1065 = vmatpush1.msra.mxu0 %v934
    %1066 = vmatprep.subr.mxu0 0.0
    %1067 = vmatpush1.msra.mxu0 %v935
    %1068 = vmatprep.subr.mxu0 0.0
    %1069 = vmatpush1.msra.mxu0 %v936
    %1070 = vmatprep.subr.mxu0 0.0
    %1071 = vmatpush1.msra.mxu0 %v937
    %1072 = vmatprep.subr.mxu0 0.0
    %1073 = vmatpush1.msra.mxu0 %v938
    %1074 = vmatprep.subr.mxu0 0.0
    %1075 = vmatpush1.msra.mxu0 0.0
    %1076 = vmatprep.subr.mxu0 0.0
    %1077 = vmatpush1.msra.mxu0 0.0
    %1078 = vmatprep.subr.mxu0 0.0
    %1079 = vmatpush1.msra.mxu0 0.0
    %1080 = vmatprep.subr.mxu0 0.0
    %1081 = vmatpush1.msra.mxu0 0.0
    %1082 = vmatprep.subr.mxu0 0.0
    %1083 = vmatpush1.msra.mxu0 0.0
    %1084 = vmatprep.subr.mxu0 0.0
    %1085 = vmatpush1.msra.mxu0 0.0
    %1086 = vmatprep.subr.mxu0 0.0
    %1087 = vmatpush1.msra.mxu0 0.0
    %1088 = vmatprep.subr.mxu0 0.0
    %1089 = vmatpush1.msra.mxu0 0.0
    %1090 = vmatprep.subr.mxu0 0.0
    %1091 = vmatpush1.msra.mxu0 0.0
    %1092 = vmatprep.subr.mxu0 0.0
    %1093 = vmatpush1.msra.mxu0 0.0
    %1094 = vmatprep.subr.mxu0 0.0
    %1095 = vmatpush1.msra.mxu0 0.0
    %1096 = vmatprep.subr.mxu0 0.0
    %1097 = vmatpush1.msra.mxu0 0.0
    %1098 = vmatprep.subr.mxu0 0.0
    %1099 = vmatpush1.msra.mxu0 0.0
    %1100 = vmatprep.subr.mxu0 0.0
    %1101 = vmatpush1.msra.mxu0 0.0
    %1102 = vmatprep.subr.mxu0 0.0
    %1103 = vmatpush1.msra.mxu0 0.0
    %1104 = vmatprep.subr.mxu0 0.0
    %1105 = vmatpush1.msra.mxu0 0.0
    %1106 = vmatprep.mubr.f32.mxu0 0.0
    %1107 = vmatmul.mubr.f32.gmra.mrb[0].mxu0 %v957
    %v1108 = vpop.f32.mrb[0].mxu0
    %v1109 = vadd.f32 %v1034, %v1108
    %v1110 = vpop.f32.mrb[0].mxu0
    %1111 = vmatprep.mubr.f32.mxu0 0.0
    %1112 = vmatmul.mubr.f32.gmra.mrb[0].mxu0 %v960
    %v1113 = vpop.f32.mrb[0].mxu0
    %v1114 = vadd.f32 %v1039, %v1113
    %v1115 = vpop.f32.mrb[0].mxu0
    %1116 = vdwg.mxu0
    %v1117 = vmax.f32 %v1109, 0.0
    %v1118 = vmax.f32 %v1114, 0.0
    %v1119 = vadd.f32 %v1117, %v659
    %v1120 = vadd.f32 %v1118, %v660
    %v1121 = vmax.f32 %v1119, 0.0
    %v1122 = vmax.f32 %v1120, 0.0
    %v1123 = vld [vmem:[#allocation12] sm:$0xff]
    %v1124 = vld [vmem:[#allocation12 + $0x8] sm:$0xff]
    %v1125 = vld [vmem:[#allocation12 + $0x10] sm:$0xff]
    %v1126 = vld [vmem:[#allocation12 + $0x18] sm:$0xff]
    %v1127 = vld [vmem:[#allocation12 + $0x20] sm:$0xff]
    %v1128 = vld [vmem:[#allocation12 + $0x28] sm:$0xff]
    %v1129 = vld [vmem:[#allocation12 + $0x30] sm:$0xff]
    %v1130 = vld [vmem:[#allocation12 + $0x38] sm:$0xff]
    %v1131 = vld [vmem:[#allocation12 + $0x40] sm:$0xff]
    %v1132 = vld [vmem:[#allocation12 + $0x48] sm:$0xff]
    %v1133 = vld [vmem:[#allocation12 + $0x50] sm:$0xff]
    %v1134 = vld [vmem:[#allocation12 + $0x58] sm:$0xff]
    %v1135 = vld [vmem:[#allocation12 + $0x60] sm:$0xff]
    %v1136 = vld [vmem:[#allocation12 + $0x68] sm:$0xff]
    %v1137 = vld [vmem:[#allocation12 + $0x70] sm:$0xff]
    %v1138 = vld [vmem:[#allocation12 + $0x78] sm:$0xff]
    %v1139 = vld [vmem:[%s8] sm:$0x1]
    %v1141 = vlaneseq
    %v1142 = vshrl.u32 %v1141, 7
    %v1143 = vsub.s32 0, %v1142
    %v1144 = vrot.slane %v1139, %v1143
    %v1148 = vrot.slane %v1121, 7
    %v1149 = vrot.slane %v1122, 6
    %vm1150 = vcmask 1041409
    %v1151 = vsel %vm1150, %v1149, %v1148
    %1153 = vmatprep.subr.mxu0 0.0
    %1154 = vmatpush1.msra.mxu0 %v1123
    %1155 = vmatprep.subr.mxu0 0.0
    %1156 = vmatpush1.msra.mxu0 %v1124
    %1157 = vmatprep.subr.mxu0 0.0
    %1158 = vmatpush1.msra.mxu0 %v1125
    %1159 = vmatprep.subr.mxu0 0.0
    %1160 = vmatpush1.msra.mxu0 %v1126
    %1161 = vmatprep.subr.mxu0 0.0
    %1162 = vmatpush1.msra.mxu0 %v1127
    %1163 = vmatprep.subr.mxu0 0.0
    %1164 = vmatpush1.msra.mxu0 %v1128
    %1165 = vmatprep.subr.mxu0 0.0
    %1166 = vmatpush1.msra.mxu0 %v1129
    %1167 = vmatprep.subr.mxu0 0.0
    %1168 = vmatpush1.msra.mxu0 %v1130
    %1169 = vmatprep.subr.mxu0 0.0
    %1170 = vmatpush1.msra.mxu0 %v1131
    %1171 = vmatprep.subr.mxu0 0.0
    %1172 = vmatpush1.msra.mxu0 %v1132
    %1173 = vmatprep.subr.mxu0 0.0
    %1174 = vmatpush1.msra.mxu0 %v1133
    %1175 = vmatprep.subr.mxu0 0.0
    %1176 = vmatpush1.msra.mxu0 %v1134
    %1177 = vmatprep.subr.mxu0 0.0
    %1178 = vmatpush1.msra.mxu0 %v1135
    %1179 = vmatprep.subr.mxu0 0.0
    %1180 = vmatpush1.msra.mxu0 %v1136
    %1181 = vmatprep.subr.mxu0 0.0
    %1182 = vmatpush1.msra.mxu0 %v1137
    %1183 = vmatprep.subr.mxu0 0.0
    %1184 = vmatpush1.msra.mxu0 %v1138
    %1185 = vmatprep.subr.mxu0 0.0
    %1186 = vmatpush1.msra.mxu0 0.0
    %1187 = vmatprep.subr.mxu0 0.0
    %1188 = vmatpush1.msra.mxu0 0.0
    %1189 = vmatprep.subr.mxu0 0.0
    %1190 = vmatpush1.msra.mxu0 0.0
    %1191 = vmatprep.subr.mxu0 0.0
    %1192 = vmatpush1.msra.mxu0 0.0
    %1193 = vmatprep.subr.mxu0 0.0
    %1194 = vmatpush1.msra.mxu0 0.0
    %1195 = vmatprep.subr.mxu0 0.0
    %1196 = vmatpush1.msra.mxu0 0.0
    %1197 = vmatprep.subr.mxu0 0.0
    %1198 = vmatpush1.msra.mxu0 0.0
    %1199 = vmatprep.subr.mxu0 0.0
    %1200 = vmatpush1.msra.mxu0 0.0
    %1201 = vmatprep.subr.mxu0 0.0
    %1202 = vmatpush1.msra.mxu0 0.0
    %1203 = vmatprep.subr.mxu0 0.0
    %1204 = vmatpush1.msra.mxu0 0.0
    %1205 = vmatprep.subr.mxu0 0.0
    %1206 = vmatpush1.msra.mxu0 0.0
    %1207 = vmatprep.subr.mxu0 0.0
    %1208 = vmatpush1.msra.mxu0 0.0
    %1209 = vmatprep.subr.mxu0 0.0
    %1210 = vmatpush1.msra.mxu0 0.0
    %1211 = vmatprep.subr.mxu0 0.0
    %1212 = vmatpush1.msra.mxu0 0.0
    %1213 = vmatprep.subr.mxu0 0.0
    %1214 = vmatpush1.msra.mxu0 0.0
    %1215 = vmatprep.subr.mxu0 0.0
    %1216 = vmatpush1.msra.mxu0 0.0
    %1217 = vmatprep.mubr.f32.mxu0 0.0
    %1218 = vmatmul.mubr.f32.gmra.mrb[0].mxu0 %v1151
    %v1219 = vpop.f32.mrb[0].mxu0
    %v1220 = vadd.f32 %v1144, %v1219
    %v1221 = vpop.f32.mrb[0].mxu0
    %1222 = vdwg.mxu0
    %1223 = vst [vmem:[#allocation13] sm:$0x3] %v1220
    // Predicated region
    $region58: #{tpu_custom_call.1} parent=1 // pred_check
      _
    $region59: #{tpu_custom_call.1} parent=1 // pred_check_branch
      %1225 = sbr.rel (0) target = $region61
    $region60: #{tpu_custom_call.1} parent=1 // pred_region
      %s1227 = ssub.s32 32, 32
      %1228 = vsyncadd [#allocation6], %s1227
      %s1230 = sshll.u32 [#allocation13], 4
      %s1231 = int_to_ptr.vmem [resolvable:$true] %s1230
      %1233 = dma.vmem_to_hbm [thread:$0]  %s1231, 32, %s9, [#allocation6]
    $region61: #{tpu_custom_call.1} parent=1 // pred_fallthru
      _
    // Predicated region
    $region62: #{tpu_custom_call.1} parent=1 // pred_check
      _
    $region63: #{tpu_custom_call.1} parent=1 // pred_check_branch
      %1235 = sbr.rel (0) target = $region65
    $region64: #{tpu_custom_call.1} parent=1 // pred_region
      %1236 = dma.done [#allocation6], 32
    $region65: #{tpu_custom_call.1} parent=1 // pred_fallthru
      _
    %1237 = vsyncpa [#allocation5], 1
    %1238 = vsyncpa [#allocation8], 1
    %1239 = vsyncpa [#allocation11], 1
    %1240 = vsyncpa [#allocation6], 1

</llo_original>
